<compile_context>
chip_gen: v6e
topology: v6e:2x2x1
jax: 0.10.0
libtpu: 0.0.40
codegen_flags: <defaults>
</compile_context>

<pallas_src>
import math
import functools

import jax
import jax.numpy as jnp
from jax.experimental import pallas as pl
from jax.experimental.pallas import tpu as pltpu

NUM_GROUPS = 8
EPS = 1e-6


def _cp_blocks_kernel(x_ref, gavg_ref, gb_ref, wqkv_ref, bqkv_ref,
                      wo_ref, bo_ref, o_ref, *, c_real, eps):
    """One (cp_block, batch) pair per grid step.  x_ref block: (1, N, Cp)."""
    x = x_ref[0].astype(jnp.float32)                          # (N, Cp)
    n, cp = x.shape

    # ---- GroupNorm: per-channel token reductions + group-broadcast matmul ----
    col_sum = jnp.sum(x, axis=0, keepdims=True)               # (1, Cp)
    col_sq = jnp.sum(x * x, axis=0, keepdims=True)            # (1, Cp)
    # gavg[i, j] = 1/(N*cg) iff channels i, j are real and in the same group.
    mean = jnp.dot(col_sum, gavg_ref[...],
                   preferred_element_type=jnp.float32)        # (1, Cp)
    ex2 = jnp.dot(col_sq, gavg_ref[...],
                  preferred_element_type=jnp.float32)         # (1, Cp)
    var = ex2 - mean * mean
    gb = gb_ref[0]                                            # (2, Cp)
    gamma = gb[0:1]
    beta = gb[1:2]
    xn = (x - mean) * (jax.lax.rsqrt(var + eps) * gamma) + beta  # (N, Cp), f32

    # ---- fused QKV projection: one bf16 MXU matmul, f32 accumulation ----
    qkv = jnp.dot(xn.astype(jnp.bfloat16), wqkv_ref[0],
                  preferred_element_type=jnp.float32) + bqkv_ref[0]  # (N, 3Cp)
    scale = 1.0 / math.sqrt(c_real)
    q = qkv[:, :cp] * scale          # fold 1/sqrt(C) into q (N*C muls, not N*N)
    k = qkv[:, cp:2 * cp]
    v = qkv[:, 2 * cp:]

    # ---- softmax attention; normalization deferred past the PV matmul ----
    s = jax.lax.dot_general(q.astype(jnp.bfloat16), k.astype(jnp.bfloat16),
                            (((1,), (1,)), ((), ())),
                            preferred_element_type=jnp.float32)      # (N, N)
    s = s - jnp.max(s, axis=-1, keepdims=True)
    p = jnp.exp(s)
    l = jnp.sum(p, axis=-1, keepdims=True)                           # (N, 1)
    attn = jnp.dot(p.astype(jnp.bfloat16), v.astype(jnp.bfloat16),
                   preferred_element_type=jnp.float32)               # (N, Cp)
    attn = attn * pl.reciprocal(l, approx=True)                      # EUP slot

    # ---- output projection + residual ----
    out = jnp.dot(attn.astype(jnp.bfloat16), wo_ref[0],
                  preferred_element_type=jnp.float32) + bo_ref[0]
    o_ref[0, 0] = (out + x).astype(o_ref.dtype)


def _round_up(v, m):
    return ((v + m - 1) // m) * m


def cp_blocks_encoder(x_nchw, block_params, num_groups=NUM_GROUPS, eps=EPS):
    """forward(x) -> [cp_block(x) for cp_block in cp_blocks], one pallas_call."""
    B, C, H, W = x_nchw.shape
    N = H * W
    Cp = _round_up(C, 128)                      # lane-dense channel dim
    nb = len(block_params)
    cg = C // num_groups

    # NCHW -> (B, N, C) -> pad channels to Cp, ONCE for all blocks.
    x_bnc = jnp.transpose(x_nchw, (0, 2, 3, 1)).reshape(B, N, C)
    x_bnc = jnp.pad(x_bnc.astype(jnp.float32), ((0, 0), (0, 0), (0, Cp - C)))

    # Group-average matrix (shared across blocks / batch).
    ch = jnp.arange(Cp)
    same_group = ((ch[:, None] // cg == ch[None, :] // cg)
                  & (ch[:, None] < C) & (ch[None, :] < C))
    gavg = same_group.astype(jnp.float32) / float(N * cg)     # (Cp, Cp)

    # Pack / pad / stack per-block parameters.
    def pad_mat(w):                              # (C, C) -> (Cp, Cp)
        return jnp.pad(w, ((0, Cp - C), (0, Cp - C)))

    def pad_vec(b):                              # (C,) -> (1, Cp)
        return jnp.pad(b.reshape(1, C), ((0, 0), (0, Cp - C)))

    gb_l, wqkv_l, bqkv_l, wo_l, bo_l = [], [], [], [], []
    for p in block_params:
        gb_l.append(jnp.concatenate([pad_vec(p["gamma"]), pad_vec(p["beta"])],
                                    axis=0))
        wqkv_l.append(jnp.concatenate(
            [pad_mat(p["wq"]), pad_mat(p["wk"]), pad_mat(p["wv"])], axis=1))
        bqkv_l.append(jnp.concatenate(
            [pad_vec(p["bq"]), pad_vec(p["bk"]), pad_vec(p["bv"])], axis=1))
        wo_l.append(pad_mat(p["wo"]))
        bo_l.append(pad_vec(p["bo"]))

    gb = jnp.stack(gb_l).astype(jnp.float32)                 # (nb, 2, Cp)
    wqkv = jnp.stack(wqkv_l).astype(jnp.bfloat16)            # (nb, Cp, 3Cp)
    bqkv = jnp.stack(bqkv_l).astype(jnp.float32)             # (nb, 1, 3Cp)
    wo = jnp.stack(wo_l).astype(jnp.bfloat16)                # (nb, Cp, Cp)
    bo = jnp.stack(bo_l).astype(jnp.float32)                 # (nb, 1, Cp)

    kernel = functools.partial(_cp_blocks_kernel, c_real=C, eps=eps)

    out = pl.pallas_call(
        kernel,
        out_shape=jax.ShapeDtypeStruct((nb, B, N, Cp), jnp.float32),
        grid=(nb, B),
        in_specs=[
            pl.BlockSpec((1, N, Cp), lambda blk, b: (b, 0, 0)),          # x
            pl.BlockSpec((Cp, Cp), lambda blk, b: (0, 0)),               # gavg
            pl.BlockSpec((1, 2, Cp), lambda blk, b: (blk, 0, 0)),        # gamma/beta
            pl.BlockSpec((1, Cp, 3 * Cp), lambda blk, b: (blk, 0, 0)),   # w_qkv
            pl.BlockSpec((1, 1, 3 * Cp), lambda blk, b: (blk, 0, 0)),    # b_qkv
            pl.BlockSpec((1, Cp, Cp), lambda blk, b: (blk, 0, 0)),       # w_o
            pl.BlockSpec((1, 1, Cp), lambda blk, b: (blk, 0, 0)),        # b_o
        ],
        out_specs=pl.BlockSpec((1, 1, N, Cp), lambda blk, b: (blk, b, 0, 0)),
        compiler_params=pltpu.CompilerParams(
            dimension_semantics=("parallel", "parallel")),
    )(x_bnc, gavg, gb, wqkv, bqkv, wo, bo)

    out = out[..., :C].reshape(nb, B, H, W, C)
    out = jnp.transpose(out, (0, 1, 4, 2, 3)).astype(x_nchw.dtype)
    return [out[i] for i in range(nb)]


# ---------------- pure-JAX reference (for correctness check) ----------------
def cpattn_ref(x_nchw, params):
    B, C, H, W = x_nchw.shape
    x = jnp.transpose(x_nchw, (0, 2, 3, 1)).reshape(B, H * W, C).astype(jnp.float32)
    xg = x.reshape(B, H * W, NUM_GROUPS, C // NUM_GROUPS)
    mu = xg.mean(axis=(1, 3), keepdims=True)
    var = ((xg - mu) ** 2).mean(axis=(1, 3), keepdims=True)
    xn = ((xg - mu) / jnp.sqrt(var + EPS)).reshape(B, H * W, C)
    xn = xn * params["gamma"][None, None, :] + params["beta"][None, None, :]
    q = jnp.einsum("bnc,cd->bnd", xn, params["wq"]) + params["bq"]
    k = jnp.einsum("bnc,cd->bnd", xn, params["wk"]) + params["bk"]
    v = jnp.einsum("bnc,cd->bnd", xn, params["wv"]) + params["bv"]
    s = jnp.einsum("bnc,bmc->bnm", q, k) / math.sqrt(C)
    p = jax.nn.softmax(s, axis=-1)
    attn = jnp.einsum("bnm,bmc->bnc", p, v)
    out = jnp.einsum("bnc,cd->bnd", attn, params["wo"]) + params["bo"] + x
    return jnp.transpose(out.reshape(B, H, W, C), (0, 3, 1, 2))


def make_block_params(key, c):
    ks = jax.random.split(key, 4)

    def w(k):
        return 0.02 * jax.random.normal(k, (c, c), jnp.float32)

    return dict(
        gamma=jnp.ones((c,), jnp.float32),
        beta=jnp.zeros((c,), jnp.float32),
        wq=w(ks[0]), bq=jnp.zeros((c,), jnp.float32),
        wk=w(ks[1]), bk=jnp.zeros((c,), jnp.float32),
        wv=w(ks[2]), bv=jnp.zeros((c,), jnp.float32),
        wo=w(ks[3]), bo=jnp.zeros((c,), jnp.float32),
    )


if __name__ == "__main__":
    key = jax.random.PRNGKey(0)

    B, C, H, W = 2, 32, 16, 16          # all down_blocks share out_channels=C
    num_down_blocks = 3                 # simulated len(down_blocks)

    kx, kp = jax.random.split(key)
    x = jax.random.normal(kx, (B, C, H, W), jnp.float32)

    block_params = [make_block_params(jax.random.fold_in(kp, i), C)
                    for i in range(num_down_blocks)]

    outs = cp_blocks_encoder(x, block_params)
    outs = [jax.block_until_ready(o) for o in outs]

    # correctness check against pure-f32 JAX reference (kernel uses bf16 MXU
    # matmuls + approx reciprocal, so allow a slightly looser tolerance)
    for o, p in zip(outs, block_params):
        r = cpattn_ref(x, p)
        assert o.shape == (B, C, H, W)
        err = float(jnp.max(jnp.abs(o - r)))
        assert err < 5e-3, err

    print("KERNEL_OK")
</pallas_src>

<mosaic_0001>
module attributes {stable_mosaic.version = 11 : i64} {
  func.func @_cp_blocks_kernel(%arg0: i32, %arg1: i32, %arg2: memref<1x256x128xf32, #tpu.memory_space<vmem>>, %arg3: memref<128x128xf32, #tpu.memory_space<vmem>>, %arg4: memref<1x2x128xf32, #tpu.memory_space<vmem>>, %arg5: memref<1x128x384xbf16, #tpu.memory_space<vmem>>, %arg6: memref<1x1x384xf32, #tpu.memory_space<vmem>>, %arg7: memref<1x128x128xbf16, #tpu.memory_space<vmem>>, %arg8: memref<1x1x128xf32, #tpu.memory_space<vmem>>, %arg9: memref<1x1x256x128xf32, #tpu.memory_space<vmem>>) attributes {dimension_semantics = [#tpu.dimension_semantics<parallel>, #tpu.dimension_semantics<parallel>], iteration_bounds = array<i64: 3, 2>, scalar_prefetch = 0 : i64, scratch_operands = 0 : i64, tpu.core_type = #tpu.core_type<tc>, window_params = [{transform_indices = @transform_0, window_bounds = array<i64: 1, 256, 128>}, {pipeline_mode = #tpu.pipeline_mode<synchronous>, transform_indices = @transform_1, window_bounds = array<i64: 128, 128>}, {transform_indices = @transform_2, window_bounds = array<i64: 1, 2, 128>}, {transform_indices = @transform_3, window_bounds = array<i64: 1, 128, 384>}, {transform_indices = @transform_4, window_bounds = array<i64: 1, 1, 384>}, {transform_indices = @transform_5, window_bounds = array<i64: 1, 128, 128>}, {transform_indices = @transform_6, window_bounds = array<i64: 1, 1, 128>}, {transform_indices = @transform_7, window_bounds = array<i64: 1, 1, 256, 128>}]} {
    %c0 = arith.constant 0 : index
    %c0_0 = arith.constant 0 : index
    %c0_1 = arith.constant 0 : index
    %0 = vector.load %arg2[%c0, %c0_0, %c0_1] : memref<1x256x128xf32, #tpu.memory_space<vmem>>, vector<1x256x128xf32>
    %1 = vector.shape_cast %0 : vector<1x256x128xf32> to vector<256x128xf32>
    %cst = arith.constant dense<0.000000e+00> : vector<128xf32>
    %2 = vector.multi_reduction <add>, %1, %cst [0] : vector<256x128xf32> to vector<128xf32>
    %3 = vector.shape_cast %2 : vector<128xf32> to vector<1x128xf32>
    %4 = arith.mulf %1, %1 : vector<256x128xf32>
    %cst_2 = arith.constant dense<0.000000e+00> : vector<128xf32>
    %5 = vector.multi_reduction <add>, %4, %cst_2 [0] : vector<256x128xf32> to vector<128xf32>
    %6 = vector.shape_cast %5 : vector<128xf32> to vector<1x128xf32>
    %c0_3 = arith.constant 0 : index
    %c0_4 = arith.constant 0 : index
    %7 = vector.load %arg3[%c0_3, %c0_4] : memref<128x128xf32, #tpu.memory_space<vmem>>, vector<128x128xf32>
    %cst_5 = arith.constant dense<0.000000e+00> : vector<1x128xf32>
    %8 = tpu.matmul %3, %7, %cst_5 {dimension_numbers = #tpu.dot_dimension_numbers<[1], [0], [0], [1], [0, 0, 1, 1], [], []>} : vector<1x128xf32>, vector<128x128xf32>, vector<1x128xf32> -> vector<1x128xf32>
    %c0_6 = arith.constant 0 : index
    %c0_7 = arith.constant 0 : index
    %9 = vector.load %arg3[%c0_6, %c0_7] : memref<128x128xf32, #tpu.memory_space<vmem>>, vector<128x128xf32>
    %cst_8 = arith.constant dense<0.000000e+00> : vector<1x128xf32>
    %10 = tpu.matmul %6, %9, %cst_8 {dimension_numbers = #tpu.dot_dimension_numbers<[1], [0], [0], [1], [0, 0, 1, 1], [], []>} : vector<1x128xf32>, vector<128x128xf32>, vector<1x128xf32> -> vector<1x128xf32>
    %11 = arith.mulf %8, %8 : vector<1x128xf32>
    %12 = arith.subf %10, %11 : vector<1x128xf32>
    %c0_9 = arith.constant 0 : index
    %c0_10 = arith.constant 0 : index
    %c0_11 = arith.constant 0 : index
    %13 = vector.load %arg4[%c0_9, %c0_10, %c0_11] : memref<1x2x128xf32, #tpu.memory_space<vmem>>, vector<1x2x128xf32>
    %14 = vector.shape_cast %13 : vector<1x2x128xf32> to vector<2x128xf32>
    %15 = vector.extract_strided_slice %14 {offsets = [0, 0], sizes = [1, 128], strides = [1, 1]} : vector<2x128xf32> to vector<1x128xf32>
    %16 = vector.extract_strided_slice %14 {offsets = [1, 0], sizes = [1, 128], strides = [1, 1]} : vector<2x128xf32> to vector<1x128xf32>
    %17 = vector.broadcast %8 : vector<1x128xf32> to vector<256x128xf32>
    %18 = arith.subf %1, %17 : vector<256x128xf32>
    %cst_12 = arith.constant 9.99999997E-7 : f32
    %19 = vector.broadcast %cst_12 : f32 to vector<1x128xf32>
    %20 = arith.addf %12, %19 : vector<1x128xf32>
    %21 = math.rsqrt %20 : vector<1x128xf32>
    %22 = arith.mulf %21, %15 : vector<1x128xf32>
    %23 = vector.broadcast %22 : vector<1x128xf32> to vector<256x128xf32>
    %24 = arith.mulf %18, %23 : vector<256x128xf32>
    %25 = vector.broadcast %16 : vector<1x128xf32> to vector<256x128xf32>
    %26 = arith.addf %24, %25 : vector<256x128xf32>
    %27 = arith.truncf %26 : vector<256x128xf32> to vector<256x128xbf16>
    %c0_13 = arith.constant 0 : index
    %c0_14 = arith.constant 0 : index
    %c0_15 = arith.constant 0 : index
    %28 = vector.load %arg5[%c0_13, %c0_14, %c0_15] : memref<1x128x384xbf16, #tpu.memory_space<vmem>>, vector<1x128x384xbf16>
    %29 = vector.shape_cast %28 : vector<1x128x384xbf16> to vector<128x384xbf16>
    %cst_16 = arith.constant dense<0.000000e+00> : vector<256x384xf32>
    %30 = tpu.matmul %27, %29, %cst_16 {dimension_numbers = #tpu.dot_dimension_numbers<[1], [0], [0], [1], [0, 0, 1, 1], [], []>} : vector<256x128xbf16>, vector<128x384xbf16>, vector<256x384xf32> -> vector<256x384xf32>
    %c0_17 = arith.constant 0 : index
    %c0_18 = arith.constant 0 : index
    %c0_19 = arith.constant 0 : index
    %31 = vector.load %arg6[%c0_17, %c0_18, %c0_19] : memref<1x1x384xf32, #tpu.memory_space<vmem>>, vector<1x1x384xf32>
    %32 = vector.shape_cast %31 : vector<1x1x384xf32> to vector<1x384xf32>
    %33 = vector.broadcast %32 : vector<1x384xf32> to vector<256x384xf32>
    %34 = arith.addf %30, %33 : vector<256x384xf32>
    %35 = vector.extract_strided_slice %34 {offsets = [0, 0], sizes = [256, 128], strides = [1, 1]} : vector<256x384xf32> to vector<256x128xf32>
    %cst_20 = arith.constant 0.176776692 : f32
    %36 = vector.broadcast %cst_20 : f32 to vector<256x128xf32>
    %37 = arith.mulf %35, %36 : vector<256x128xf32>
    %38 = vector.extract_strided_slice %34 {offsets = [0, 128], sizes = [256, 128], strides = [1, 1]} : vector<256x384xf32> to vector<256x128xf32>
    %39 = vector.extract_strided_slice %34 {offsets = [0, 256], sizes = [256, 128], strides = [1, 1]} : vector<256x384xf32> to vector<256x128xf32>
    %40 = arith.truncf %37 : vector<256x128xf32> to vector<256x128xbf16>
    %41 = arith.truncf %38 : vector<256x128xf32> to vector<256x128xbf16>
    %cst_21 = arith.constant dense<0.000000e+00> : vector<256x256xf32>
    %42 = tpu.matmul %40, %41, %cst_21 {dimension_numbers = #tpu.dot_dimension_numbers<[1], [1], [0], [0], [0, 0, 1, 0], [], []>} : vector<256x128xbf16>, vector<256x128xbf16>, vector<256x256xf32> -> vector<256x256xf32>
    %cst_22 = arith.constant dense<0xFF800000> : vector<256xf32>
    %43 = vector.multi_reduction <maximumf>, %42, %cst_22 [1] : vector<256x256xf32> to vector<256xf32>
    %44 = vector.shape_cast %43 : vector<256xf32> to vector<256x1xf32>
    %45 = vector.broadcast %44 : vector<256x1xf32> to vector<256x256xf32>
    %46 = arith.subf %42, %45 : vector<256x256xf32>
    %47 = math.exp %46 : vector<256x256xf32>
    %cst_23 = arith.constant dense<0.000000e+00> : vector<256xf32>
    %48 = vector.multi_reduction <add>, %47, %cst_23 [1] : vector<256x256xf32> to vector<256xf32>
    %49 = vector.shape_cast %48 : vector<256xf32> to vector<256x1xf32>
    %50 = arith.truncf %47 : vector<256x256xf32> to vector<256x256xbf16>
    %51 = arith.truncf %39 : vector<256x128xf32> to vector<256x128xbf16>
    %cst_24 = arith.constant dense<0.000000e+00> : vector<256x128xf32>
    %52 = tpu.matmul %50, %51, %cst_24 {dimension_numbers = #tpu.dot_dimension_numbers<[1], [0], [0], [1], [0, 0, 1, 1], [], []>} : vector<256x256xbf16>, vector<256x128xbf16>, vector<256x128xf32> -> vector<256x128xf32>
    %53 = tpu.reciprocal %49 {approx = true} : vector<256x1xf32> -> vector<256x1xf32>
    %54 = vector.broadcast %53 : vector<256x1xf32> to vector<256x128xf32>
    %55 = arith.mulf %52, %54 : vector<256x128xf32>
    %56 = arith.truncf %55 : vector<256x128xf32> to vector<256x128xbf16>
    %c0_25 = arith.constant 0 : index
    %c0_26 = arith.constant 0 : index
    %c0_27 = arith.constant 0 : index
    %57 = vector.load %arg7[%c0_25, %c0_26, %c0_27] : memref<1x128x128xbf16, #tpu.memory_space<vmem>>, vector<1x128x128xbf16>
    %58 = vector.shape_cast %57 : vector<1x128x128xbf16> to vector<128x128xbf16>
    %cst_28 = arith.constant dense<0.000000e+00> : vector<256x128xf32>
    %59 = tpu.matmul %56, %58, %cst_28 {dimension_numbers = #tpu.dot_dimension_numbers<[1], [0], [0], [1], [0, 0, 1, 1], [], []>} : vector<256x128xbf16>, vector<128x128xbf16>, vector<256x128xf32> -> vector<256x128xf32>
    %c0_29 = arith.constant 0 : index
    %c0_30 = arith.constant 0 : index
    %c0_31 = arith.constant 0 : index
    %60 = vector.load %arg8[%c0_29, %c0_30, %c0_31] : memref<1x1x128xf32, #tpu.memory_space<vmem>>, vector<1x1x128xf32>
    %61 = vector.shape_cast %60 : vector<1x1x128xf32> to vector<1x128xf32>
    %62 = vector.broadcast %61 : vector<1x128xf32> to vector<256x128xf32>
    %63 = arith.addf %59, %62 : vector<256x128xf32>
    %64 = arith.addf %63, %1 : vector<256x128xf32>
    %c0_32 = arith.constant 0 : index
    %c0_33 = arith.constant 0 : index
    %c0_34 = arith.constant 0 : index
    %c0_35 = arith.constant 0 : index
    %65 = vector.load %arg9[%c0_32, %c0_33, %c0_34, %c0_35] : memref<1x1x256x128xf32, #tpu.memory_space<vmem>>, vector<1x1x256x128xf32>
    %66 = vector.shape_cast %65 : vector<1x1x256x128xf32> to vector<256x128xf32>
    %67 = vector.shape_cast %64 : vector<256x128xf32> to vector<1x1x256x128xf32>
    tpu.vector_store %arg9[%c0_32, %c0_33, %c0_34, %c0_35], %67 {strides = array<i32>} : memref<1x1x256x128xf32, #tpu.memory_space<vmem>>, vector<1x1x256x128xf32>,
    return
  }
  func.func @transform_0(%arg0: i32, %arg1: i32) -> (i32, i32, i32) {
    %c0_i32 = arith.constant 0 : i32
    %c0_i32_0 = arith.constant 0 : i32
    %c0_i32_1 = arith.constant 0 : i32
    return %arg1, %c0_i32, %c0_i32_0 : i32, i32, i32
  }
  func.func @transform_1(%arg0: i32, %arg1: i32) -> (i32, i32) {
    %c0_i32 = arith.constant 0 : i32
    %c0_i32_0 = arith.constant 0 : i32
    %c0_i32_1 = arith.constant 0 : i32
    return %c0_i32, %c0_i32_0 : i32, i32
  }
  func.func @transform_2(%arg0: i32, %arg1: i32) -> (i32, i32, i32) {
    %c0_i32 = arith.constant 0 : i32
    %c0_i32_0 = arith.constant 0 : i32
    %c0_i32_1 = arith.constant 0 : i32
    return %arg0, %c0_i32, %c0_i32_0 : i32, i32, i32
  }
  func.func @transform_3(%arg0: i32, %arg1: i32) -> (i32, i32, i32) {
    %c0_i32 = arith.constant 0 : i32
    %c0_i32_0 = arith.constant 0 : i32
    %c0_i32_1 = arith.constant 0 : i32
    return %arg0, %c0_i32, %c0_i32_0 : i32, i32, i32
  }
  func.func @transform_4(%arg0: i32, %arg1: i32) -> (i32, i32, i32) {
    %c0_i32 = arith.constant 0 : i32
    %c0_i32_0 = arith.constant 0 : i32
    %c0_i32_1 = arith.constant 0 : i32
    return %arg0, %c0_i32, %c0_i32_0 : i32, i32, i32
  }
  func.func @transform_5(%arg0: i32, %arg1: i32) -> (i32, i32, i32) {
    %c0_i32 = arith.constant 0 : i32
    %c0_i32_0 = arith.constant 0 : i32
    %c0_i32_1 = arith.constant 0 : i32
    return %arg0, %c0_i32, %c0_i32_0 : i32, i32, i32
  }
  func.func @transform_6(%arg0: i32, %arg1: i32) -> (i32, i32, i32) {
    %c0_i32 = arith.constant 0 : i32
    %c0_i32_0 = arith.constant 0 : i32
    %c0_i32_1 = arith.constant 0 : i32
    return %arg0, %c0_i32, %c0_i32_0 : i32, i32, i32
  }
  func.func @transform_7(%arg0: i32, %arg1: i32) -> (i32, i32, i32, i32) {
    %c0_i32 = arith.constant 0 : i32
    %c0_i32_0 = arith.constant 0 : i32
    %c0_i32_1 = arith.constant 0 : i32
    return %arg0, %arg1, %c0_i32, %c0_i32_0 : i32, i32, i32, i32
  }
}

</mosaic_0001>

<llo_original>
// kernel: tpu_custom_call.1
$region0: #{tpu_custom_call.1}
  #allocation0 [shape = 'u32[]', space=smem, size = 0x4, offset = 0x4, fixed_abs, tag = 'smem constant byte address 0x4 - core index']
  #allocation1 [shape = 'u32[144,128]{1,0:T(1,128)}', space=vmem, size = 0x12000, scoped, tag = 'internal scratch']
  %s0 = inlined_call_operand.hbm [shape: f32[2,256,128], index: 0, kind: input, shape index: {}]
  %s1 = inlined_call_operand.hbm [shape: f32[128,128], index: 1, kind: input, shape index: {}]
  %s2 = inlined_call_operand.hbm [shape: f32[3,2,128], index: 2, kind: input, shape index: {}]
  %s3 = inlined_call_operand.hbm [shape: bf16[3,128,384], index: 3, kind: input, shape index: {}]
  %s4 = inlined_call_operand.hbm [shape: f32[3,1,384], index: 4, kind: input, shape index: {}]
  %s5 = inlined_call_operand.hbm [shape: bf16[3,128,128], index: 5, kind: input, shape index: {}]
  %s6 = inlined_call_operand.vmem [shape: f32[3,1,128], index: 6, kind: input, shape index: {}]
  %s7 = inlined_call_operand.hbm [shape: f32[3,2,256,128], index: 7, kind: output, shape index: {}]
  %s8 = sld [smem:[#allocation0]]
  $region85: #{tpu_custom_call.1} parent=0
    _
  %s10 = ssub.s32 1, %s8
  %s11 = scalar_select 0, %s10, %s8
  $region1: #{tpu_custom_call.1} parent=0
    #allocation2 [shape = 'u8[262144]{0}', space=vmem, size = 0x40000, scoped, tag = 'input window, operand 0']
    #allocation3 [shape = 's32[2]{0}', space=sflag, size = 0x8, scoped, tag = 'scoped memory for tpu_custom_call.1']
    #allocation4 [shape = 's32[2]{0}', space=sflag, size = 0x8, scoped, tag = 'scoped memory for tpu_custom_call.1']
    #allocation5 [shape = 'u8[65536]{0}', space=vmem, size = 0x10000, scoped, tag = 'input window, operand 1, single buffered']
    #allocation6 [shape = 's32[1]{0}', space=sflag, size = 0x4, scoped, tag = 'scoped memory for tpu_custom_call.1']
    #allocation7 [shape = 'u8[2048]{0}', space=vmem, size = 0x800, scoped, tag = 'input window, operand 2']
    #allocation8 [shape = 'u8[196608]{0}', space=vmem, size = 0x30000, scoped, tag = 'input window, operand 3']
    #allocation9 [shape = 'u8[3072]{0}', space=vmem, size = 0xc00, scoped, tag = 'input window, operand 4']
    #allocation10 [shape = 'u8[65536]{0}', space=vmem, size = 0x10000, scoped, tag = 'input window, operand 5']
    #allocation11 [shape = 'u8[262144]{0}', space=vmem, size = 0x40000, scoped, tag = 'output window, operand 0']
    %12 = vsyncpa [#allocation3], 0
    %s13 = scalar_lea.sflag [#allocation3], 1
    %14 = vsyncpa %s13, 0
    %15 = vsyncpa [#allocation6], 0
    %16 = vsyncpa [#allocation4], 0
    %s17 = scalar_lea.sflag [#allocation4], 1
    %18 = vsyncpa %s17, 0
    loop: start=0, step=1, limit=8
    $region2: #{tpu_custom_call.1} parent=1 // loop_pre_header
      _
    $region3: #{tpu_custom_call.1} parent=1 // loop_header
      %s20 = sphi 0, %s24
      %p21 = scmp.ge.s32.totalorder %s20, 8
      %s27 = sphi 0, %s39
      %s28 = sphi 0, %s35
      %s29 = sphi 0, %s27
      %s30 = sphi 0, %s28
      %s31 = sphi 0, %s29
      %s32 = sphi 0, %s30
      %s42 = sphi 0, %s44
      %s45 = sphi 0, %s42
      %s46 = sphi 0, %s45
      %s62 = sphi 0, %s46
      %s66 = sphi 0, %s66
      %s68 = sphi 0, %s66
      %s69 = sphi 0, %s68
      %s83 = sphi 0, %s69
      %s89 = sphi 0, %s91
      %s92 = sphi 0, %s89
      %s93 = sphi 0, %s92
      %s109 = sphi 0, %s93
      %s115 = sphi 0, %s117
      %s118 = sphi 0, %s115
      %s119 = sphi 0, %s118
      %s135 = sphi 0, %s119
      %s141 = sphi 0, %s143
      %s144 = sphi 0, %s141
      %s145 = sphi 0, %s144
      %s161 = sphi 0, %s145
      %s167 = sphi 0, %s169
      %s170 = sphi 0, %s167
      %s171 = sphi 0, %s170
      %s187 = sphi 0, %s171
      %s193 = sphi 0, %s195
      %s196 = sphi 0, %s193
      %s197 = sphi 0, %s196
      %s213 = sphi 0, %s197
      %s221 = sphi 0, %s223
      %s224 = sphi 0, %s221
      %s225 = sphi 0, %s224
      %s241 = sphi 0, %s225
    $region4: #{tpu_custom_call.1} parent=1 // loop_header_branch
      %23 = sbr.rel (%p21) target = $region8
    $region5: #{tpu_custom_call.1} parent=1 // loop_body
      %s25 = ssub.s32 %s20, 1
      %s26 = ssub.s32 %s20, 2
      %s33 = sadd.s32 1, %s28
      %p34 = scmp.ge.s32.totalorder %s33, 2
      %s35 = scalar_select %p34, 0, %s33
      %s36 = sadd.s32 1, %s27
      %s37 = scalar_select %p34, %s36, %s27
      %p38 = scmp.ge.s32.totalorder %s37, 3
      %s39 = scalar_select %p38, 0, %s37
      %s40 = ssub.s32 %s28, %s35
      %p41 = scmp.eq.s32.totalorder %s40, 0
      %s43 = sadd.s32 %s42, 1
      %s44 = scalar_select %p41, %s42, %s43
      %p47 = pneg %p41
      %p48 = scmp.eq.s32.totalorder %s20, 5
      %p49 = por %p47, %p48
      %p50 = scmp.ne.s32.totalorder %s42, %s45
      %p51 = scmp.eq.s32.totalorder %s20, 0
      %p52 = por %p50, %p51
      %p53 = scmp.ne.s32.totalorder %s42, %s45
      %p54 = scmp.eq.s32.totalorder %s25, 5
      %p55 = por %p53, %p54
      %p56 = scmp.ne.s32.totalorder %s45, %s46
      %p57 = scmp.eq.s32.totalorder %s25, 0
      %p58 = por %p56, %p57
      %p59 = scmp.ne.s32.totalorder %s45, %s46
      %p60 = scmp.eq.s32.totalorder %s26, 5
      %p61 = por %p59, %p60
      %p63 = scmp.ne.s32.totalorder %s46, %s62
      %p64 = scmp.eq.s32.totalorder %s26, 0
      %p65 = por %p63, %p64
      %s67 = sadd.s32 %s66, 1
      %p70 = scmp.eq.s32.totalorder %s20, 5
      %p71 = scmp.ne.s32.totalorder %s66, %s68
      %p72 = scmp.eq.s32.totalorder %s20, 0
      %p73 = por %p71, %p72
      %p74 = scmp.ne.s32.totalorder %s66, %s68
      %p75 = scmp.eq.s32.totalorder %s25, 5
      %p76 = por %p74, %p75
      %p77 = scmp.ne.s32.totalorder %s68, %s69
      %p78 = scmp.eq.s32.totalorder %s25, 0
      %p79 = por %p77, %p78
      %p80 = scmp.ne.s32.totalorder %s68, %s69
      %p81 = scmp.eq.s32.totalorder %s26, 5
      %p82 = por %p80, %p81
      %p84 = scmp.ne.s32.totalorder %s69, %s83
      %p85 = scmp.eq.s32.totalorder %s26, 0
      %p86 = por %p84, %p85
      %s87 = ssub.s32 %s27, %s39
      %p88 = scmp.eq.s32.totalorder %s87, 0
      %s90 = sadd.s32 %s89, 1
      %s91 = scalar_select %p88, %s89, %s90
      %p94 = pneg %p88
      %p95 = scmp.eq.s32.totalorder %s20, 5
      %p96 = por %p94, %p95
      %p97 = scmp.ne.s32.totalorder %s89, %s92
      %p98 = scmp.eq.s32.totalorder %s20, 0
      %p99 = por %p97, %p98
      %p100 = scmp.ne.s32.totalorder %s89, %s92
      %p101 = scmp.eq.s32.totalorder %s25, 5
      %p102 = por %p100, %p101
      %p103 = scmp.ne.s32.totalorder %s92, %s93
      %p104 = scmp.eq.s32.totalorder %s25, 0
      %p105 = por %p103, %p104
      %p106 = scmp.ne.s32.totalorder %s92, %s93
      %p107 = scmp.eq.s32.totalorder %s26, 5
      %p108 = por %p106, %p107
      %p110 = scmp.ne.s32.totalorder %s93, %s109
      %p111 = scmp.eq.s32.totalorder %s26, 0
      %p112 = por %p110, %p111
      %s113 = ssub.s32 %s27, %s39
      %p114 = scmp.eq.s32.totalorder %s113, 0
      %s116 = sadd.s32 %s115, 1
      %s117 = scalar_select %p114, %s115, %s116
      %p120 = pneg %p114
      %p121 = scmp.eq.s32.totalorder %s20, 5
      %p122 = por %p120, %p121
      %p123 = scmp.ne.s32.totalorder %s115, %s118
      %p124 = scmp.eq.s32.totalorder %s20, 0
      %p125 = por %p123, %p124
      %p126 = scmp.ne.s32.totalorder %s115, %s118
      %p127 = scmp.eq.s32.totalorder %s25, 5
      %p128 = por %p126, %p127
      %p129 = scmp.ne.s32.totalorder %s118, %s119
      %p130 = scmp.eq.s32.totalorder %s25, 0
      %p131 = por %p129, %p130
      %p132 = scmp.ne.s32.totalorder %s118, %s119
      %p133 = scmp.eq.s32.totalorder %s26, 5
      %p134 = por %p132, %p133
      %p136 = scmp.ne.s32.totalorder %s119, %s135
      %p137 = scmp.eq.s32.totalorder %s26, 0
      %p138 = por %p136, %p137
      %s139 = ssub.s32 %s27, %s39
      %p140 = scmp.eq.s32.totalorder %s139, 0
      %s142 = sadd.s32 %s141, 1
      %s143 = scalar_select %p140, %s141, %s142
      %p146 = pneg %p140
      %p147 = scmp.eq.s32.totalorder %s20, 5
      %p148 = por %p146, %p147
      %p149 = scmp.ne.s32.totalorder %s141, %s144
      %p150 = scmp.eq.s32.totalorder %s20, 0
      %p151 = por %p149, %p150
      %p152 = scmp.ne.s32.totalorder %s141, %s144
      %p153 = scmp.eq.s32.totalorder %s25, 5
      %p154 = por %p152, %p153
      %p155 = scmp.ne.s32.totalorder %s144, %s145
      %p156 = scmp.eq.s32.totalorder %s25, 0
      %p157 = por %p155, %p156
      %p158 = scmp.ne.s32.totalorder %s144, %s145
      %p159 = scmp.eq.s32.totalorder %s26, 5
      %p160 = por %p158, %p159
      %p162 = scmp.ne.s32.totalorder %s145, %s161
      %p163 = scmp.eq.s32.totalorder %s26, 0
      %p164 = por %p162, %p163
      %s165 = ssub.s32 %s27, %s39
      %p166 = scmp.eq.s32.totalorder %s165, 0
      %s168 = sadd.s32 %s167, 1
      %s169 = scalar_select %p166, %s167, %s168
      %p172 = pneg %p166
      %p173 = scmp.eq.s32.totalorder %s20, 5
      %p174 = por %p172, %p173
      %p175 = scmp.ne.s32.totalorder %s167, %s170
      %p176 = scmp.eq.s32.totalorder %s20, 0
      %p177 = por %p175, %p176
      %p178 = scmp.ne.s32.totalorder %s167, %s170
      %p179 = scmp.eq.s32.totalorder %s25, 5
      %p180 = por %p178, %p179
      %p181 = scmp.ne.s32.totalorder %s170, %s171
      %p182 = scmp.eq.s32.totalorder %s25, 0
      %p183 = por %p181, %p182
      %p184 = scmp.ne.s32.totalorder %s170, %s171
      %p185 = scmp.eq.s32.totalorder %s26, 5
      %p186 = por %p184, %p185
      %p188 = scmp.ne.s32.totalorder %s171, %s187
      %p189 = scmp.eq.s32.totalorder %s26, 0
      %p190 = por %p188, %p189
      %s191 = ssub.s32 %s27, %s39
      %p192 = scmp.eq.s32.totalorder %s191, 0
      %s194 = sadd.s32 %s193, 1
      %s195 = scalar_select %p192, %s193, %s194
      %p198 = pneg %p192
      %p199 = scmp.eq.s32.totalorder %s20, 5
      %p200 = por %p198, %p199
      %p201 = scmp.ne.s32.totalorder %s193, %s196
      %p202 = scmp.eq.s32.totalorder %s20, 0
      %p203 = por %p201, %p202
      %p204 = scmp.ne.s32.totalorder %s193, %s196
      %p205 = scmp.eq.s32.totalorder %s25, 5
      %p206 = por %p204, %p205
      %p207 = scmp.ne.s32.totalorder %s196, %s197
      %p208 = scmp.eq.s32.totalorder %s25, 0
      %p209 = por %p207, %p208
      %p210 = scmp.ne.s32.totalorder %s196, %s197
      %p211 = scmp.eq.s32.totalorder %s26, 5
      %p212 = por %p210, %p211
      %p214 = scmp.ne.s32.totalorder %s197, %s213
      %p215 = scmp.eq.s32.totalorder %s26, 0
      %p216 = por %p214, %p215
      %s217 = ssub.s32 %s27, %s39
      %s218 = ssub.s32 %s28, %s35
      %s219 = sor.u32 %s217, %s218
      %p220 = scmp.eq.s32.totalorder %s219, 0
      %s222 = sadd.s32 %s221, 1
      %s223 = scalar_select %p220, %s221, %s222
      %p226 = pneg %p220
      %p227 = scmp.eq.s32.totalorder %s20, 5
      %p228 = por %p226, %p227
      %p229 = scmp.ne.s32.totalorder %s221, %s224
      %p230 = scmp.eq.s32.totalorder %s20, 0
      %p231 = por %p229, %p230
      %p232 = scmp.ne.s32.totalorder %s221, %s224
      %p233 = scmp.eq.s32.totalorder %s25, 5
      %p234 = por %p232, %p233
      %p235 = scmp.ne.s32.totalorder %s224, %s225
      %p236 = scmp.eq.s32.totalorder %s25, 0
      %p237 = por %p235, %p236
      %p238 = scmp.ne.s32.totalorder %s224, %s225
      %p239 = scmp.eq.s32.totalorder %s26, 5
      %p240 = por %p238, %p239
      %p242 = scmp.ne.s32.totalorder %s225, %s241
      %p243 = scmp.eq.s32.totalorder %s26, 0
      %p244 = por %p242, %p243
      %p245 = scmp.le.s32.totalorder 1, %s20
      %p246 = scmp.lt.s32.totalorder %s20, 7
      %p247 = pnand %p245, %p246
      %p248 = pneg %p247
      // Predicated region
      $region9: #{tpu_custom_call.1} parent=5 // pred_check
        _
      $region10: #{tpu_custom_call.1} parent=5 // pred_check_branch
        %250 = sbr.rel (%p247) target = $region12
      $region11: #{tpu_custom_call.1} parent=5 // pred_region
        %s251 = ssub.s32 %s20, 1
        // Predicated region
        $region13: #{tpu_custom_call.1} parent=11 // pred_check
          %p252 = pneg %p79
        $region14: #{tpu_custom_call.1} parent=11 // pred_check_branch
          %254 = sbr.rel (%p252) target = $region16
        $region15: #{tpu_custom_call.1} parent=11 // pred_region
          %s256 = ssub.s32 2048, 2048
          %257 = vsyncadd [#allocation6], %s256
          %s258 = sshll.u32 [#allocation5], 4
          %s259 = int_to_ptr.vmem [resolvable:$true] %s258
          %264 = dma.hbm_to_vmem [thread:$0]  %s1, 2048, %s259, [#allocation6], 128, 128, 8
        $region16: #{tpu_custom_call.1} parent=11 // pred_fallthru
          _
      $region12: #{tpu_custom_call.1} parent=5 // pred_fallthru
        _
      %p265 = scmp.lt.s32.totalorder %s20, 6
      // Predicated region
      $region17: #{tpu_custom_call.1} parent=5 // pred_check
        %p266 = pneg %p265
      $region18: #{tpu_custom_call.1} parent=5 // pred_check_branch
        %268 = sbr.rel (%p266) target = $region20
      $region19: #{tpu_custom_call.1} parent=5 // pred_region
        // Predicated region
        $region21: #{tpu_custom_call.1} parent=19 // pred_check
          %p269 = pneg %p52
        $region22: #{tpu_custom_call.1} parent=19 // pred_check_branch
          %271 = sbr.rel (%p269) target = $region24
        $region23: #{tpu_custom_call.1} parent=19 // pred_region
          %s272 = sand.u32 %s20, 1
          %s273 = scalar_lea.sflag [#allocation3], %s272
          %s274 = sand.u32 %s42, 1
          %s275 = smul.addr %s274, 256
          %s276 = scalar_lea.vmem [#allocation2], %s275
          %s278 = ssub.s32 4096, 4096
          %279 = vsyncadd %s273, %s278
          %s280 = smul.addr %s28, 32
          %s281 = smul.addr %s280, 128
          %s282 = scalar_lea.hbm %s0, %s281
          %s283 = sshll.u32 %s276, 4
          %s284 = int_to_ptr.vmem [resolvable:$true] %s283
          %289 = dma.hbm_to_vmem [thread:$0]  %s282, 4096, %s284, %s273, 128, 128, 8
        $region24: #{tpu_custom_call.1} parent=19 // pred_fallthru
          _
        // Predicated region
        $region25: #{tpu_custom_call.1} parent=19 // pred_check
          %p290 = pneg %p99
        $region26: #{tpu_custom_call.1} parent=19 // pred_check_branch
          %292 = sbr.rel (%p290) target = $region28
        $region27: #{tpu_custom_call.1} parent=19 // pred_region
          %s293 = sand.u32 %s20, 1
          %s294 = scalar_lea.sflag [#allocation3], %s293
          %s295 = sand.u32 %s89, 1
          %s296 = smul.addr %s295, 2
          %s297 = scalar_lea.vmem [#allocation7], %s296
          %s299 = ssub.s32 32, 32
          %300 = vsyncadd %s294, %s299
          %s301 = smul.addr %s27, 32
          %s302 = scalar_lea.hbm %s2, %s301
          %s304 = sshll.u32 %s297, 4
          %s305 = int_to_ptr.vmem [resolvable:$true] %s304
          %307 = dma.hbm_to_vmem [thread:$0]  %s302, 32, %s305, %s294
        $region28: #{tpu_custom_call.1} parent=19 // pred_fallthru
          _
        // Predicated region
        $region29: #{tpu_custom_call.1} parent=19 // pred_check
          %p308 = pneg %p125
        $region30: #{tpu_custom_call.1} parent=19 // pred_check_branch
          %310 = sbr.rel (%p308) target = $region32
        $region31: #{tpu_custom_call.1} parent=19 // pred_region
          %s311 = sand.u32 %s20, 1
          %s312 = scalar_lea.sflag [#allocation3], %s311
          %s313 = sand.u32 %s115, 1
          %s314 = smul.addr %s313, 192
          %s315 = scalar_lea.vmem [#allocation8], %s314
          %s317 = ssub.s32 3072, 3072
          %318 = vsyncadd %s312, %s317
          %s319 = smul.addr %s27, 48
          %s320 = smul.addr %s319, 64
          %s321 = scalar_lea.hbm %s3, %s320
          %s322 = sshll.u32 %s315, 4
          %s323 = int_to_ptr.vmem [resolvable:$true] %s322
          %328 = dma.hbm_to_vmem [thread:$0]  %s321, 3072, %s323, %s312, 192, 192, 12
        $region32: #{tpu_custom_call.1} parent=19 // pred_fallthru
          _
        // Predicated region
        $region33: #{tpu_custom_call.1} parent=19 // pred_check
          %p329 = pneg %p151
        $region34: #{tpu_custom_call.1} parent=19 // pred_check_branch
          %331 = sbr.rel (%p329) target = $region36
        $region35: #{tpu_custom_call.1} parent=19 // pred_region
          %s332 = sand.u32 %s20, 1
          %s333 = scalar_lea.sflag [#allocation3], %s332
          %s334 = sand.u32 %s141, 1
          %s335 = smul.addr %s334, 3
          %s336 = scalar_lea.vmem [#allocation9], %s335
          %s338 = ssub.s32 48, 48
          %339 = vsyncadd %s333, %s338
          %s340 = smul.addr %s27, 3
          %s341 = smul.addr %s340, 16
          %s342 = scalar_lea.hbm %s4, %s341
          %s344 = sshll.u32 %s336, 4
          %s345 = int_to_ptr.vmem [resolvable:$true] %s344
          %347 = dma.hbm_to_vmem [thread:$0]  %s342, 48, %s345, %s333
        $region36: #{tpu_custom_call.1} parent=19 // pred_fallthru
          _
        // Predicated region
        $region37: #{tpu_custom_call.1} parent=19 // pred_check
          %p348 = pneg %p177
        $region38: #{tpu_custom_call.1} parent=19 // pred_check_branch
          %350 = sbr.rel (%p348) target = $region40
        $region39: #{tpu_custom_call.1} parent=19 // pred_region
          %s351 = sand.u32 %s20, 1
          %s352 = scalar_lea.sflag [#allocation3], %s351
          %s353 = sand.u32 %s167, 1
          %s354 = smul.addr %s353, 64
          %s355 = scalar_lea.vmem [#allocation10], %s354
          %s357 = ssub.s32 1024, 1024
          %358 = vsyncadd %s352, %s357
          %s359 = smul.addr %s27, 16
          %s360 = smul.addr %s359, 64
          %s361 = scalar_lea.hbm %s5, %s360
          %s362 = sshll.u32 %s355, 4
          %s363 = int_to_ptr.vmem [resolvable:$true] %s362
          %368 = dma.hbm_to_vmem [thread:$0]  %s361, 1024, %s363, %s352, 64, 64, 4
        $region40: #{tpu_custom_call.1} parent=19 // pred_fallthru
          _
        // Predicated region
        $region41: #{tpu_custom_call.1} parent=19 // pred_check
          %p369 = pneg %p203
        $region42: #{tpu_custom_call.1} parent=19 // pred_check_branch
          %371 = sbr.rel (%p369) target = $region44
        $region43: #{tpu_custom_call.1} parent=19 // pred_region
          %p372 = scmp.lt.s32.totalorder %s27, 2
          %s373 = scalar_select %p372, %s27, 2
          %s374 = scalar_lea.vmem %s6, %s373
        $region44: #{tpu_custom_call.1} parent=19 // pred_fallthru
          _
      $region20: #{tpu_custom_call.1} parent=5 // pred_fallthru
        _
      %p375 = scmp.le.s32.totalorder 1, %s20
      %p376 = scmp.lt.s32.totalorder %s20, 7
      %p377 = pnand %p375, %p376
      %p378 = pneg %p377
      // Predicated region
      $region45: #{tpu_custom_call.1} parent=5 // pred_check
        _
      $region46: #{tpu_custom_call.1} parent=5 // pred_check_branch
        %380 = sbr.rel (%p377) target = $region48
      $region47: #{tpu_custom_call.1} parent=5 // pred_region
        %s381 = ssub.s32 %s20, 1
        %s382 = sand.u32 %s25, 1
        %s383 = scalar_lea.sflag [#allocation3], %s382
        %s384 = sand.u32 %s45, 1
        %s385 = smul.addr %s384, 256
        %s386 = scalar_lea.vmem [#allocation2], %s385
        // Predicated region
        $region49: #{tpu_custom_call.1} parent=47 // pred_check
          %p387 = pneg %p58
        $region50: #{tpu_custom_call.1} parent=47 // pred_check_branch
          %389 = sbr.rel (%p387) target = $region52
        $region51: #{tpu_custom_call.1} parent=47 // pred_region
          %390 = dma.done %s383, 4096
        $region52: #{tpu_custom_call.1} parent=47 // pred_fallthru
          _
        // Predicated region
        $region53: #{tpu_custom_call.1} parent=47 // pred_check
          %p391 = pneg %p79
        $region54: #{tpu_custom_call.1} parent=47 // pred_check_branch
          %393 = sbr.rel (%p391) target = $region56
        $region55: #{tpu_custom_call.1} parent=47 // pred_region
          %394 = dma.done [#allocation6], 2048
        $region56: #{tpu_custom_call.1} parent=47 // pred_fallthru
          _
        %s395 = sand.u32 %s25, 1
        %s396 = scalar_lea.sflag [#allocation3], %s395
        %s397 = sand.u32 %s92, 1
        %s398 = smul.addr %s397, 2
        %s399 = scalar_lea.vmem [#allocation7], %s398
        // Predicated region
        $region57: #{tpu_custom_call.1} parent=47 // pred_check
          %p400 = pneg %p105
        $region58: #{tpu_custom_call.1} parent=47 // pred_check_branch
          %402 = sbr.rel (%p400) target = $region60
        $region59: #{tpu_custom_call.1} parent=47 // pred_region
          %403 = dma.done %s396, 32
        $region60: #{tpu_custom_call.1} parent=47 // pred_fallthru
          _
        %s404 = sand.u32 %s25, 1
        %s405 = scalar_lea.sflag [#allocation3], %s404
        %s406 = sand.u32 %s118, 1
        %s407 = smul.addr %s406, 192
        %s408 = scalar_lea.vmem [#allocation8], %s407
        // Predicated region
        $region61: #{tpu_custom_call.1} parent=47 // pred_check
          %p409 = pneg %p131
        $region62: #{tpu_custom_call.1} parent=47 // pred_check_branch
          %411 = sbr.rel (%p409) target = $region64
        $region63: #{tpu_custom_call.1} parent=47 // pred_region
          %412 = dma.done %s405, 3072
        $region64: #{tpu_custom_call.1} parent=47 // pred_fallthru
          _
        %s413 = sand.u32 %s25, 1
        %s414 = scalar_lea.sflag [#allocation3], %s413
        %s415 = sand.u32 %s144, 1
        %s416 = smul.addr %s415, 3
        %s417 = scalar_lea.vmem [#allocation9], %s416
        // Predicated region
        $region65: #{tpu_custom_call.1} parent=47 // pred_check
          %p418 = pneg %p157
        $region66: #{tpu_custom_call.1} parent=47 // pred_check_branch
          %420 = sbr.rel (%p418) target = $region68
        $region67: #{tpu_custom_call.1} parent=47 // pred_region
          %421 = dma.done %s414, 48
        $region68: #{tpu_custom_call.1} parent=47 // pred_fallthru
          _
        %s422 = sand.u32 %s25, 1
        %s423 = scalar_lea.sflag [#allocation3], %s422
        %s424 = sand.u32 %s170, 1
        %s425 = smul.addr %s424, 64
        %s426 = scalar_lea.vmem [#allocation10], %s425
        // Predicated region
        $region69: #{tpu_custom_call.1} parent=47 // pred_check
          %p427 = pneg %p183
        $region70: #{tpu_custom_call.1} parent=47 // pred_check_branch
          %429 = sbr.rel (%p427) target = $region72
        $region71: #{tpu_custom_call.1} parent=47 // pred_region
          %430 = dma.done %s423, 1024
        $region72: #{tpu_custom_call.1} parent=47 // pred_fallthru
          _
        %s431 = sand.u32 %s25, 1
        %s432 = scalar_lea.sflag [#allocation3], %s431
        %s433 = sand.u32 %s45, 1
        %s434 = smul.addr %s433, 256
        %s435 = scalar_lea.vmem [#allocation2], %s434
        %p436 = pneg %p58
        %p437 = pneg %p55
        %p438 = pneg %p79
        %p439 = pneg %p76
        %s440 = sand.u32 %s25, 1
        %s441 = scalar_lea.sflag [#allocation3], %s440
        %s442 = sand.u32 %s92, 1
        %s443 = smul.addr %s442, 2
        %s444 = scalar_lea.vmem [#allocation7], %s443
        %p445 = pneg %p105
        %p446 = pneg %p102
        %s447 = sand.u32 %s25, 1
        %s448 = scalar_lea.sflag [#allocation3], %s447
        %s449 = sand.u32 %s118, 1
        %s450 = smul.addr %s449, 192
        %s451 = scalar_lea.vmem [#allocation8], %s450
        %p452 = pneg %p131
        %p453 = pneg %p128
        %s454 = sand.u32 %s25, 1
        %s455 = scalar_lea.sflag [#allocation3], %s454
        %s456 = sand.u32 %s144, 1
        %s457 = smul.addr %s456, 3
        %s458 = scalar_lea.vmem [#allocation9], %s457
        %p459 = pneg %p157
        %p460 = pneg %p154
        %s461 = sand.u32 %s25, 1
        %s462 = scalar_lea.sflag [#allocation3], %s461
        %s463 = sand.u32 %s170, 1
        %s464 = smul.addr %s463, 64
        %s465 = scalar_lea.vmem [#allocation10], %s464
        %p466 = pneg %p183
        %p467 = pneg %p180
        %p468 = scmp.lt.s32.totalorder %s29, 2
        %s469 = scalar_select %p468, %s29, 2
        %s470 = scalar_lea.vmem %s6, %s469
        %p471 = pneg %p209
        %p472 = pneg %p206
        %p473 = pneg %p237
        %p474 = pneg %p234
        %s475 = sand.u32 %s224, 1
        %s476 = scalar_lea.sflag [#allocation4], %s475
        %s477 = sand.u32 %s224, 1
        %s478 = smul.addr %s477, 256
        %s479 = scalar_lea.vmem [#allocation11], %s478
        %p480 = scmp.lt.s32.totalorder %s29, 2
        %s481 = scalar_select %p480, %s29, 2
        %s482 = scalar_lea.vmem %s6, %s481
        %v484 = vld [vmem:[%s386] sm:$0xff]
        %v485 = vld [vmem:[%s386 + $0x8] sm:$0xff]
        %v486 = vld [vmem:[%s386 + $0x10] sm:$0xff]
        %v487 = vld [vmem:[%s386 + $0x18] sm:$0xff]
        %v488 = vld [vmem:[%s386 + $0x20] sm:$0xff]
        %v489 = vld [vmem:[%s386 + $0x28] sm:$0xff]
        %v490 = vld [vmem:[%s386 + $0x30] sm:$0xff]
        %v491 = vld [vmem:[%s386 + $0x38] sm:$0xff]
        %v492 = vld [vmem:[%s386 + $0x40] sm:$0xff]
        %v493 = vld [vmem:[%s386 + $0x48] sm:$0xff]
        %v494 = vld [vmem:[%s386 + $0x50] sm:$0xff]
        %v495 = vld [vmem:[%s386 + $0x58] sm:$0xff]
        %v496 = vld [vmem:[%s386 + $0x60] sm:$0xff]
        %v497 = vld [vmem:[%s386 + $0x68] sm:$0xff]
        %v498 = vld [vmem:[%s386 + $0x70] sm:$0xff]
        %v499 = vld [vmem:[%s386 + $0x78] sm:$0xff]
        %v500 = vld [vmem:[%s386 + $0x80] sm:$0xff]
        %v501 = vld [vmem:[%s386 + $0x88] sm:$0xff]
        %v502 = vld [vmem:[%s386 + $0x90] sm:$0xff]
        %v503 = vld [vmem:[%s386 + $0x98] sm:$0xff]
        %v504 = vld [vmem:[%s386 + $0xa0] sm:$0xff]
        %v505 = vld [vmem:[%s386 + $0xa8] sm:$0xff]
        %v506 = vld [vmem:[%s386 + $0xb0] sm:$0xff]
        %v507 = vld [vmem:[%s386 + $0xb8] sm:$0xff]
        %v508 = vld [vmem:[%s386 + $0xc0] sm:$0xff]
        %v509 = vld [vmem:[%s386 + $0xc8] sm:$0xff]
        %v510 = vld [vmem:[%s386 + $0xd0] sm:$0xff]
        %v511 = vld [vmem:[%s386 + $0xd8] sm:$0xff]
        %v512 = vld [vmem:[%s386 + $0xe0] sm:$0xff]
        %v513 = vld [vmem:[%s386 + $0xe8] sm:$0xff]
        %v514 = vld [vmem:[%s386 + $0xf0] sm:$0xff]
        %v515 = vld [vmem:[%s386 + $0xf8] sm:$0xff]
        %v516 = vadd.f32 %v484, %v485
        %v517 = vadd.f32 %v516, %v486
        %v518 = vadd.f32 %v517, %v487
        %v519 = vadd.f32 %v518, %v488
        %v520 = vadd.f32 %v519, %v489
        %v521 = vadd.f32 %v520, %v490
        %v522 = vadd.f32 %v521, %v491
        %v523 = vadd.f32 %v522, %v492
        %v524 = vadd.f32 %v523, %v493
        %v525 = vadd.f32 %v524, %v494
        %v526 = vadd.f32 %v525, %v495
        %v527 = vadd.f32 %v526, %v496
        %v528 = vadd.f32 %v527, %v497
        %v529 = vadd.f32 %v528, %v498
        %v530 = vadd.f32 %v529, %v499
        %v531 = vadd.f32 %v530, %v500
        %v532 = vadd.f32 %v531, %v501
        %v533 = vadd.f32 %v532, %v502
        %v534 = vadd.f32 %v533, %v503
        %v535 = vadd.f32 %v534, %v504
        %v536 = vadd.f32 %v535, %v505
        %v537 = vadd.f32 %v536, %v506
        %v538 = vadd.f32 %v537, %v507
        %v539 = vadd.f32 %v538, %v508
        %v540 = vadd.f32 %v539, %v509
        %v541 = vadd.f32 %v540, %v510
        %v542 = vadd.f32 %v541, %v511
        %v543 = vadd.f32 %v542, %v512
        %v544 = vadd.f32 %v543, %v513
        %v545 = vadd.f32 %v544, %v514
        %v546 = vadd.f32 %v545, %v515
        %v547 = vrot.slane %v546, 4
        %v548 = vadd.f32 %v546, %v547
        %v549 = vrot.slane %v548, 2
        %v550 = vadd.f32 %v548, %v549
        %v551 = vrot.slane %v550, 1
        %v552 = vadd.f32 %v550, %v551
        %v553 = vmul.f32 %v484, %v484
        %v554 = vmul.f32 %v485, %v485
        %v555 = vmul.f32 %v486, %v486
        %v556 = vmul.f32 %v487, %v487
        %v557 = vmul.f32 %v488, %v488
        %v558 = vmul.f32 %v489, %v489
        %v559 = vmul.f32 %v490, %v490
        %v560 = vmul.f32 %v491, %v491
        %v561 = vmul.f32 %v492, %v492
        %v562 = vmul.f32 %v493, %v493
        %v563 = vmul.f32 %v494, %v494
        %v564 = vmul.f32 %v495, %v495
        %v565 = vmul.f32 %v496, %v496
        %v566 = vmul.f32 %v497, %v497
        %v567 = vmul.f32 %v498, %v498
        %v568 = vmul.f32 %v499, %v499
        %v569 = vmul.f32 %v500, %v500
        %v570 = vmul.f32 %v501, %v501
        %v571 = vmul.f32 %v502, %v502
        %v572 = vmul.f32 %v503, %v503
        %v573 = vmul.f32 %v504, %v504
        %v574 = vmul.f32 %v505, %v505
        %v575 = vmul.f32 %v506, %v506
        %v576 = vmul.f32 %v507, %v507
        %v577 = vmul.f32 %v508, %v508
        %v578 = vmul.f32 %v509, %v509
        %v579 = vmul.f32 %v510, %v510
        %v580 = vmul.f32 %v511, %v511
        %v581 = vmul.f32 %v512, %v512
        %v582 = vmul.f32 %v513, %v513
        %v583 = vmul.f32 %v514, %v514
        %v584 = vmul.f32 %v515, %v515
        %v585 = vadd.f32 %v553, %v554
        %v586 = vadd.f32 %v585, %v555
        %v587 = vadd.f32 %v586, %v556
        %v588 = vadd.f32 %v587, %v557
        %v589 = vadd.f32 %v588, %v558
        %v590 = vadd.f32 %v589, %v559
        %v591 = vadd.f32 %v590, %v560
        %v592 = vadd.f32 %v591, %v561
        %v593 = vadd.f32 %v592, %v562
        %v594 = vadd.f32 %v593, %v563
        %v595 = vadd.f32 %v594, %v564
        %v596 = vadd.f32 %v595, %v565
        %v597 = vadd.f32 %v596, %v566
        %v598 = vadd.f32 %v597, %v567
        %v599 = vadd.f32 %v598, %v568
        %v600 = vadd.f32 %v599, %v569
        %v601 = vadd.f32 %v600, %v570
        %v602 = vadd.f32 %v601, %v571
        %v603 = vadd.f32 %v602, %v572
        %v604 = vadd.f32 %v603, %v573
        %v605 = vadd.f32 %v604, %v574
        %v606 = vadd.f32 %v605, %v575
        %v607 = vadd.f32 %v606, %v576
        %v608 = vadd.f32 %v607, %v577
        %v609 = vadd.f32 %v608, %v578
        %v610 = vadd.f32 %v609, %v579
        %v611 = vadd.f32 %v610, %v580
        %v612 = vadd.f32 %v611, %v581
        %v613 = vadd.f32 %v612, %v582
        %v614 = vadd.f32 %v613, %v583
        %v615 = vadd.f32 %v614, %v584
        %v616 = vrot.slane %v615, 4
        %v617 = vadd.f32 %v615, %v616
        %v618 = vrot.slane %v617, 2
        %v619 = vadd.f32 %v617, %v618
        %v620 = vrot.slane %v619, 1
        %v621 = vadd.f32 %v619, %v620
        %v622 = vld [vmem:[#allocation5] sm:$0xff]
        %v623 = vld [vmem:[#allocation5 + $0x8] sm:$0xff]
        %v624 = vld [vmem:[#allocation5 + $0x10] sm:$0xff]
        %v625 = vld [vmem:[#allocation5 + $0x18] sm:$0xff]
        %v626 = vld [vmem:[#allocation5 + $0x20] sm:$0xff]
        %v627 = vld [vmem:[#allocation5 + $0x28] sm:$0xff]
        %v628 = vld [vmem:[#allocation5 + $0x30] sm:$0xff]
        %v629 = vld [vmem:[#allocation5 + $0x38] sm:$0xff]
        %v630 = vld [vmem:[#allocation5 + $0x40] sm:$0xff]
        %v631 = vld [vmem:[#allocation5 + $0x48] sm:$0xff]
        %v632 = vld [vmem:[#allocation5 + $0x50] sm:$0xff]
        %v633 = vld [vmem:[#allocation5 + $0x58] sm:$0xff]
        %v634 = vld [vmem:[#allocation5 + $0x60] sm:$0xff]
        %v635 = vld [vmem:[#allocation5 + $0x68] sm:$0xff]
        %v636 = vld [vmem:[#allocation5 + $0x70] sm:$0xff]
        %v637 = vld [vmem:[#allocation5 + $0x78] sm:$0xff]
        %638 = vmatprep.subr.mxu0 0.0
        %639 = vmatpush1.msra.mxu0 %v637
        %640 = vmatprep.subr.mxu0 0.0
        %641 = vmatpush1.msra.mxu0 %v636
        %642 = vmatprep.subr.mxu0 0.0
        %643 = vmatpush1.msra.mxu0 %v635
        %644 = vmatprep.subr.mxu0 0.0
        %645 = vmatpush1.msra.mxu0 %v634
        %646 = vmatprep.subr.mxu0 0.0
        %647 = vmatpush1.msra.mxu0 %v633
        %648 = vmatprep.subr.mxu0 0.0
        %649 = vmatpush1.msra.mxu0 %v632
        %650 = vmatprep.subr.mxu0 0.0
        %651 = vmatpush1.msra.mxu0 %v631
        %652 = vmatprep.subr.mxu0 0.0
        %653 = vmatpush1.msra.mxu0 %v630
        %654 = vmatprep.subr.mxu0 0.0
        %655 = vmatpush1.msra.mxu0 %v629
        %656 = vmatprep.subr.mxu0 0.0
        %657 = vmatpush1.msra.mxu0 %v628
        %658 = vmatprep.subr.mxu0 0.0
        %659 = vmatpush1.msra.mxu0 %v627
        %660 = vmatprep.subr.mxu0 0.0
        %661 = vmatpush1.msra.mxu0 %v626
        %662 = vmatprep.subr.mxu0 0.0
        %663 = vmatpush1.msra.mxu0 %v625
        %664 = vmatprep.subr.mxu0 0.0
        %665 = vmatpush1.msra.mxu0 %v624
        %666 = vmatprep.subr.mxu0 0.0
        %667 = vmatpush1.msra.mxu0 %v623
        %668 = vmatprep.subr.mxu0 0.0
        %669 = vmatpush1.msra.mxu0 %v622
        %670 = vmatprep.subr.mxu0 0.0
        %671 = vmatpush2.msra.mxu0 0.0
        %672 = vmatprep.subr.mxu0 0.0
        %673 = vmatpush2.msra.mxu0 0.0
        %674 = vmatprep.subr.mxu0 0.0
        %675 = vmatpush2.msra.mxu0 0.0
        %676 = vmatprep.subr.mxu0 0.0
        %677 = vmatpush2.msra.mxu0 0.0
        %678 = vmatprep.subr.mxu0 0.0
        %679 = vmatpush2.msra.mxu0 0.0
        %680 = vmatprep.subr.mxu0 0.0
        %681 = vmatpush2.msra.mxu0 0.0
        %682 = vmatprep.subr.mxu0 0.0
        %683 = vmatpush2.msra.mxu0 0.0
        %684 = vmatprep.subr.mxu0 0.0
        %685 = vmatpush2.msra.mxu0 0.0
        %686 = vmatprep.subr.mxu0 0.0
        %687 = vmatpush2.msra.mxu0 0.0
        %688 = vmatprep.subr.mxu0 0.0
        %689 = vmatpush2.msra.mxu0 0.0
        %690 = vmatprep.subr.mxu0 0.0
        %691 = vmatpush2.msra.mxu0 0.0
        %692 = vmatprep.subr.mxu0 0.0
        %693 = vmatpush2.msra.mxu0 0.0
        %694 = vmatprep.subr.mxu0 0.0
        %695 = vmatpush2.msra.mxu0 0.0
        %696 = vmatprep.subr.mxu0 0.0
        %697 = vmatpush2.msra.mxu0 0.0
        %698 = vmatprep.subr.mxu0 0.0
        %699 = vmatpush2.msra.mxu0 0.0
        %700 = vmatprep.subr.mxu0 0.0
        %701 = vmatpush2.msra.mxu0 0.0
        %702 = vmatprep.mubr.f32.mxu0 0.0
        %703 = vmatmul.mubr.f32.gmra.mxu0 %v552
        %v704 = vpop.f32.mrf.mxu0
        %v705 = vadd.f32 0.0, %v704
        %v706 = vpop.f32.mrf.mxu0
        %707 = vdwg.mxu0
        %708 = vmatprep.subr.mxu0 0.0
        %709 = vmatpush1.msra.mxu0 %v637
        %710 = vmatprep.subr.mxu0 0.0
        %711 = vmatpush1.msra.mxu0 %v636
        %712 = vmatprep.subr.mxu0 0.0
        %713 = vmatpush1.msra.mxu0 %v635
        %714 = vmatprep.subr.mxu0 0.0
        %715 = vmatpush1.msra.mxu0 %v634
        %716 = vmatprep.subr.mxu0 0.0
        %717 = vmatpush1.msra.mxu0 %v633
        %718 = vmatprep.subr.mxu0 0.0
        %719 = vmatpush1.msra.mxu0 %v632
        %720 = vmatprep.subr.mxu0 0.0
        %721 = vmatpush1.msra.mxu0 %v631
        %722 = vmatprep.subr.mxu0 0.0
        %723 = vmatpush1.msra.mxu0 %v630
        %724 = vmatprep.subr.mxu0 0.0
        %725 = vmatpush1.msra.mxu0 %v629
        %726 = vmatprep.subr.mxu0 0.0
        %727 = vmatpush1.msra.mxu0 %v628
        %728 = vmatprep.subr.mxu0 0.0
        %729 = vmatpush1.msra.mxu0 %v627
        %730 = vmatprep.subr.mxu0 0.0
        %731 = vmatpush1.msra.mxu0 %v626
        %732 = vmatprep.subr.mxu0 0.0
        %733 = vmatpush1.msra.mxu0 %v625
        %734 = vmatprep.subr.mxu0 0.0
        %735 = vmatpush1.msra.mxu0 %v624
        %736 = vmatprep.subr.mxu0 0.0
        %737 = vmatpush1.msra.mxu0 %v623
        %738 = vmatprep.subr.mxu0 0.0
        %739 = vmatpush1.msra.mxu0 %v622
        %740 = vmatprep.subr.mxu0 0.0
        %741 = vmatpush2.msra.mxu0 0.0
        %742 = vmatprep.subr.mxu0 0.0
        %743 = vmatpush2.msra.mxu0 0.0
        %744 = vmatprep.subr.mxu0 0.0
        %745 = vmatpush2.msra.mxu0 0.0
        %746 = vmatprep.subr.mxu0 0.0
        %747 = vmatpush2.msra.mxu0 0.0
        %748 = vmatprep.subr.mxu0 0.0
        %749 = vmatpush2.msra.mxu0 0.0
        %750 = vmatprep.subr.mxu0 0.0
        %751 = vmatpush2.msra.mxu0 0.0
        %752 = vmatprep.subr.mxu0 0.0
        %753 = vmatpush2.msra.mxu0 0.0
        %754 = vmatprep.subr.mxu0 0.0
        %755 = vmatpush2.msra.mxu0 0.0
        %756 = vmatprep.subr.mxu0 0.0
        %757 = vmatpush2.msra.mxu0 0.0
        %758 = vmatprep.subr.mxu0 0.0
        %759 = vmatpush2.msra.mxu0 0.0
        %760 = vmatprep.subr.mxu0 0.0
        %761 = vmatpush2.msra.mxu0 0.0
        %762 = vmatprep.subr.mxu0 0.0
        %763 = vmatpush2.msra.mxu0 0.0
        %764 = vmatprep.subr.mxu0 0.0
        %765 = vmatpush2.msra.mxu0 0.0
        %766 = vmatprep.subr.mxu0 0.0
        %767 = vmatpush2.msra.mxu0 0.0
        %768 = vmatprep.subr.mxu0 0.0
        %769 = vmatpush2.msra.mxu0 0.0
        %770 = vmatprep.subr.mxu0 0.0
        %771 = vmatpush2.msra.mxu0 0.0
        %772 = vmatprep.mubr.f32.mxu0 0.0
        %773 = vmatmul.mubr.f32.gmra.mxu0 %v621
        %v774 = vpop.f32.mrf.mxu0
        %v775 = vadd.f32 0.0, %v774
        %v776 = vpop.f32.mrf.mxu0
        %777 = vdwg.mxu0
        %v778 = vmul.f32 %v705, %v705
        %v779 = vsub.f32 %v775, %v778
        %v780 = vld [vmem:[%s399] sm:$0x3]
        %v781 = vlaneseq
        %v782 = vshrl.u32 %v781, 7
        %v783 = vsub.s32 0, %v782
        %v784 = vrot.slane %v705, %v783
        %v785 = vsub.f32 %v484, %v784
        %v786 = vsub.f32 %v485, %v784
        %v787 = vsub.f32 %v486, %v784
        %v788 = vsub.f32 %v487, %v784
        %v789 = vsub.f32 %v488, %v784
        %v790 = vsub.f32 %v489, %v784
        %v791 = vsub.f32 %v490, %v784
        %v792 = vsub.f32 %v491, %v784
        %v793 = vsub.f32 %v492, %v784
        %v794 = vsub.f32 %v493, %v784
        %v795 = vsub.f32 %v494, %v784
        %v796 = vsub.f32 %v495, %v784
        %v797 = vsub.f32 %v496, %v784
        %v798 = vsub.f32 %v497, %v784
        %v799 = vsub.f32 %v498, %v784
        %v800 = vsub.f32 %v499, %v784
        %v801 = vsub.f32 %v500, %v784
        %v802 = vsub.f32 %v501, %v784
        %v803 = vsub.f32 %v502, %v784
        %v804 = vsub.f32 %v503, %v784
        %v805 = vsub.f32 %v504, %v784
        %v806 = vsub.f32 %v505, %v784
        %v807 = vsub.f32 %v506, %v784
        %v808 = vsub.f32 %v507, %v784
        %v809 = vsub.f32 %v508, %v784
        %v810 = vsub.f32 %v509, %v784
        %v811 = vsub.f32 %v510, %v784
        %v812 = vsub.f32 %v511, %v784
        %v813 = vsub.f32 %v512, %v784
        %v814 = vsub.f32 %v513, %v784
        %v815 = vsub.f32 %v514, %v784
        %v816 = vsub.f32 %v515, %v784
        %v817 = vadd.f32 %v779, 1e-06
        %v818 = vrsqrt.pop %v817
        %v819 = vmul.f32 %v818, %v780
        %v820 = vlaneseq
        %v821 = vshrl.u32 %v820, 7
        %v822 = vsub.s32 0, %v821
        %v823 = vrot.slane %v819, %v822
        %v824 = vmul.f32 %v785, %v823
        %v825 = vmul.f32 %v786, %v823
        %v826 = vmul.f32 %v787, %v823
        %v827 = vmul.f32 %v788, %v823
        %v828 = vmul.f32 %v789, %v823
        %v829 = vmul.f32 %v790, %v823
        %v830 = vmul.f32 %v791, %v823
        %v831 = vmul.f32 %v792, %v823
        %v832 = vmul.f32 %v793, %v823
        %v833 = vmul.f32 %v794, %v823
        %v834 = vmul.f32 %v795, %v823
        %v835 = vmul.f32 %v796, %v823
        %v836 = vmul.f32 %v797, %v823
        %v837 = vmul.f32 %v798, %v823
        %v838 = vmul.f32 %v799, %v823
        %v839 = vmul.f32 %v800, %v823
        %v840 = vmul.f32 %v801, %v823
        %v841 = vmul.f32 %v802, %v823
        %v842 = vmul.f32 %v803, %v823
        %v843 = vmul.f32 %v804, %v823
        %v844 = vmul.f32 %v805, %v823
        %v845 = vmul.f32 %v806, %v823
        %v846 = vmul.f32 %v807, %v823
        %v847 = vmul.f32 %v808, %v823
        %v848 = vmul.f32 %v809, %v823
        %v849 = vmul.f32 %v810, %v823
        %v850 = vmul.f32 %v811, %v823
        %v851 = vmul.f32 %v812, %v823
        %v852 = vmul.f32 %v813, %v823
        %v853 = vmul.f32 %v814, %v823
        %v854 = vmul.f32 %v815, %v823
        %v855 = vmul.f32 %v816, %v823
        %v856 = vlaneseq
        %v857 = vshrl.u32 %v856, 7
        %v858 = vsub.s32 1, %v857
        %v859 = vrot.slane %v780, %v858
        %v860 = vadd.f32 %v824, %v859
        %v861 = vadd.f32 %v825, %v859
        %v862 = vadd.f32 %v826, %v859
        %v863 = vadd.f32 %v827, %v859
        %v864 = vadd.f32 %v828, %v859
        %v865 = vadd.f32 %v829, %v859
        %v866 = vadd.f32 %v830, %v859
        %v867 = vadd.f32 %v831, %v859
        %v868 = vadd.f32 %v832, %v859
        %v869 = vadd.f32 %v833, %v859
        %v870 = vadd.f32 %v834, %v859
        %v871 = vadd.f32 %v835, %v859
        %v872 = vadd.f32 %v836, %v859
        %v873 = vadd.f32 %v837, %v859
        %v874 = vadd.f32 %v838, %v859
        %v875 = vadd.f32 %v839, %v859
        %v876 = vadd.f32 %v840, %v859
        %v877 = vadd.f32 %v841, %v859
        %v878 = vadd.f32 %v842, %v859
        %v879 = vadd.f32 %v843, %v859
        %v880 = vadd.f32 %v844, %v859
        %v881 = vadd.f32 %v845, %v859
        %v882 = vadd.f32 %v846, %v859
        %v883 = vadd.f32 %v847, %v859
        %v884 = vadd.f32 %v848, %v859
        %v885 = vadd.f32 %v849, %v859
        %v886 = vadd.f32 %v850, %v859
        %v887 = vadd.f32 %v851, %v859
        %v888 = vadd.f32 %v852, %v859
        %v889 = vadd.f32 %v853, %v859
        %v890 = vadd.f32 %v854, %v859
        %v891 = vadd.f32 %v855, %v859
        %v892 = vpack.c.bf16 %v861, %v860
        %v893 = vpack.c.bf16 %v863, %v862
        %v894 = vpack.c.bf16 %v865, %v864
        %v895 = vpack.c.bf16 %v867, %v866
        %v896 = vpack.c.bf16 %v869, %v868
        %v897 = vpack.c.bf16 %v871, %v870
        %v898 = vpack.c.bf16 %v873, %v872
        %v899 = vpack.c.bf16 %v875, %v874
        %v900 = vpack.c.bf16 %v877, %v876
        %v901 = vpack.c.bf16 %v879, %v878
        %v902 = vpack.c.bf16 %v881, %v880
        %v903 = vpack.c.bf16 %v883, %v882
        %v904 = vpack.c.bf16 %v885, %v884
        %v905 = vpack.c.bf16 %v887, %v886
        %v906 = vpack.c.bf16 %v889, %v888
        %v907 = vpack.c.bf16 %v891, %v890
        %v908 = vld [vmem:[%s408] sm:$0xff]
        %v909 = vld [vmem:[%s408 + $0x8] sm:$0xf]
        %v910 = vld [vmem:[%s408 + $0xc] sm:$0xff]
        %v911 = vld [vmem:[%s408 + $0x14] sm:$0xf]
        %v912 = vld [vmem:[%s408 + $0x18] sm:$0xff]
        %v913 = vld [vmem:[%s408 + $0x20] sm:$0xf]
        %v914 = vld [vmem:[%s408 + $0x24] sm:$0xff]
        %v915 = vld [vmem:[%s408 + $0x2c] sm:$0xf]
        %v916 = vld [vmem:[%s408 + $0x30] sm:$0xff]
        %v917 = vld [vmem:[%s408 + $0x38] sm:$0xf]
        %v918 = vld [vmem:[%s408 + $0x3c] sm:$0xff]
        %v919 = vld [vmem:[%s408 + $0x44] sm:$0xf]
        %v920 = vld [vmem:[%s408 + $0x48] sm:$0xff]
        %v921 = vld [vmem:[%s408 + $0x50] sm:$0xf]
        %v922 = vld [vmem:[%s408 + $0x54] sm:$0xff]
        %v923 = vld [vmem:[%s408 + $0x5c] sm:$0xf]
        %v924 = vld [vmem:[%s408 + $0x60] sm:$0xff]
        %v925 = vld [vmem:[%s408 + $0x68] sm:$0xf]
        %v926 = vld [vmem:[%s408 + $0x6c] sm:$0xff]
        %v927 = vld [vmem:[%s408 + $0x74] sm:$0xf]
        %v928 = vld [vmem:[%s408 + $0x78] sm:$0xff]
        %v929 = vld [vmem:[%s408 + $0x80] sm:$0xf]
        %v930 = vld [vmem:[%s408 + $0x84] sm:$0xff]
        %v931 = vld [vmem:[%s408 + $0x8c] sm:$0xf]
        %v932 = vld [vmem:[%s408 + $0x90] sm:$0xff]
        %v933 = vld [vmem:[%s408 + $0x98] sm:$0xf]
        %v934 = vld [vmem:[%s408 + $0x9c] sm:$0xff]
        %v935 = vld [vmem:[%s408 + $0xa4] sm:$0xf]
        %v936 = vld [vmem:[%s408 + $0xa8] sm:$0xff]
        %v937 = vld [vmem:[%s408 + $0xb0] sm:$0xf]
        %v938 = vld [vmem:[%s408 + $0xb4] sm:$0xff]
        %v939 = vld [vmem:[%s408 + $0xbc] sm:$0xf]
        %v940 = vld [vmem:[%s417] sm:$0x7]
        %v942 = vlaneseq
        %v943 = vshrl.u32 %v942, 7
        %v944 = vsub.s32 0, %v943
        %v945 = vrot.slane %v940, %v944
        %v946 = vlaneseq
        %v947 = vshrl.u32 %v946, 7
        %v948 = vsub.s32 1, %v947
        %v949 = vrot.slane %v940, %v948
        %v950 = vlaneseq
        %v951 = vshrl.u32 %v950, 7
        %v952 = vsub.s32 2, %v951
        %v953 = vrot.slane %v940, %v952
        %v989 = vunpack.c.l.b16 %v908
        %v990 = vunpack.c.h.b16 %v908
        %v991 = vunpack.c.l.b16 %v909
        %v992 = vunpack.c.l.b16 %v910
        %v993 = vunpack.c.h.b16 %v910
        %v994 = vunpack.c.l.b16 %v911
        %v995 = vunpack.c.l.b16 %v912
        %v996 = vunpack.c.h.b16 %v912
        %v997 = vunpack.c.l.b16 %v913
        %v998 = vunpack.c.l.b16 %v914
        %v999 = vunpack.c.h.b16 %v914
        %v1000 = vunpack.c.l.b16 %v915
        %v1001 = vunpack.c.l.b16 %v916
        %v1002 = vunpack.c.h.b16 %v916
        %v1003 = vunpack.c.l.b16 %v917
        %v1004 = vunpack.c.l.b16 %v918
        %v1005 = vunpack.c.h.b16 %v918
        %v1006 = vunpack.c.l.b16 %v919
        %v1007 = vunpack.c.l.b16 %v920
        %v1008 = vunpack.c.h.b16 %v920
        %v1009 = vunpack.c.l.b16 %v921
        %v1010 = vunpack.c.l.b16 %v922
        %v1011 = vunpack.c.h.b16 %v922
        %v1012 = vunpack.c.l.b16 %v923
        %v1013 = vunpack.c.l.b16 %v924
        %v1014 = vunpack.c.h.b16 %v924
        %v1015 = vunpack.c.l.b16 %v925
        %v1016 = vunpack.c.l.b16 %v926
        %v1017 = vunpack.c.h.b16 %v926
        %v1018 = vunpack.c.l.b16 %v927
        %v1019 = vunpack.c.l.b16 %v928
        %v1020 = vunpack.c.h.b16 %v928
        %v1021 = vunpack.c.l.b16 %v929
        %v1022 = vunpack.c.l.b16 %v930
        %v1023 = vunpack.c.h.b16 %v930
        %v1024 = vunpack.c.l.b16 %v931
        %v1025 = vunpack.c.l.b16 %v932
        %v1026 = vunpack.c.h.b16 %v932
        %v1027 = vunpack.c.l.b16 %v933
        %v1028 = vunpack.c.l.b16 %v934
        %v1029 = vunpack.c.h.b16 %v934
        %v1030 = vunpack.c.l.b16 %v935
        %v1031 = vunpack.c.l.b16 %v936
        %v1032 = vunpack.c.h.b16 %v936
        %v1033 = vunpack.c.l.b16 %v937
        %v1034 = vunpack.c.l.b16 %v938
        %v1035 = vunpack.c.h.b16 %v938
        %v1036 = vunpack.c.l.b16 %v939
        %v1037 = vpack.c.b16 %v992, %v989
        %v1038 = vpack.c.b16 %v993, %v990
        %v1039 = vpack.c.b16 %v994, %v991
        %v1040 = vpack.c.b16 %v998, %v995
        %v1041 = vpack.c.b16 %v999, %v996
        %v1042 = vpack.c.b16 %v1000, %v997
        %v1043 = vpack.c.b16 %v1004, %v1001
        %v1044 = vpack.c.b16 %v1005, %v1002
        %v1045 = vpack.c.b16 %v1006, %v1003
        %v1046 = vpack.c.b16 %v1010, %v1007
        %v1047 = vpack.c.b16 %v1011, %v1008
        %v1048 = vpack.c.b16 %v1012, %v1009
        %v1049 = vpack.c.b16 %v1016, %v1013
        %v1050 = vpack.c.b16 %v1017, %v1014
        %v1051 = vpack.c.b16 %v1018, %v1015
        %v1052 = vpack.c.b16 %v1022, %v1019
        %v1053 = vpack.c.b16 %v1023, %v1020
        %v1054 = vpack.c.b16 %v1024, %v1021
        %v1055 = vpack.c.b16 %v1028, %v1025
        %v1056 = vpack.c.b16 %v1029, %v1026
        %v1057 = vpack.c.b16 %v1030, %v1027
        %v1058 = vpack.c.b16 %v1034, %v1031
        %v1059 = vpack.c.b16 %v1035, %v1032
        %v1060 = vpack.c.b16 %v1036, %v1033
        %1085 = vmatprep.subr.bf16.mxu0 %v1059
        %1086 = vmatpush1.bf16.msra.mxu0 %v1058
        %1087 = vmatprep.subr.bf16.mxu0 %v1056
        %1088 = vmatpush1.bf16.msra.mxu0 %v1055
        %1089 = vmatprep.subr.bf16.mxu0 %v1053
        %1090 = vmatpush1.bf16.msra.mxu0 %v1052
        %1091 = vmatprep.subr.bf16.mxu0 %v1050
        %1092 = vmatpush1.bf16.msra.mxu0 %v1049
        %1093 = vmatprep.subr.bf16.mxu0 %v1047
        %1094 = vmatpush1.bf16.msra.mxu0 %v1046
        %1095 = vmatprep.subr.bf16.mxu0 %v1044
        %1096 = vmatpush1.bf16.msra.mxu0 %v1043
        %1097 = vmatprep.subr.bf16.mxu0 %v1041
        %1098 = vmatpush1.bf16.msra.mxu0 %v1040
        %1099 = vmatprep.subr.bf16.mxu0 %v1038
        %1100 = vmatpush1.bf16.msra.mxu0 %v1037
        %1101 = vmatprep.subr.bf16.mxu0 0
        %1102 = vmatpush2.bf16.msra.mxu0 0
        %1103 = vmatprep.subr.bf16.mxu0 0
        %1104 = vmatpush2.bf16.msra.mxu0 0
        %1105 = vmatprep.subr.bf16.mxu0 0
        %1106 = vmatpush2.bf16.msra.mxu0 0
        %1107 = vmatprep.subr.bf16.mxu0 0
        %1108 = vmatpush2.bf16.msra.mxu0 0
        %1109 = vmatprep.subr.bf16.mxu0 0
        %1110 = vmatpush2.bf16.msra.mxu0 0
        %1111 = vmatprep.subr.bf16.mxu0 0
        %1112 = vmatpush2.bf16.msra.mxu0 0
        %1113 = vmatprep.subr.bf16.mxu0 0
        %1114 = vmatpush2.bf16.msra.mxu0 0
        %1115 = vmatprep.subr.bf16.mxu0 0
        %1116 = vmatpush2.bf16.msra.mxu0 0
        %1117 = vmatprep.mubr.bf16.mxu0 0
        %1118 = vmatmul.mubr.bf16.gmra.mxu0 %v892
        %v1119 = vpop.f32.mrf.mxu0
        %v1120 = vadd.f32 %v945, %v1119
        %v1121 = vpop.f32.mrf.mxu0
        %v1122 = vadd.f32 %v949, %v1121
        %v1123 = vpop.f32.mrf.mxu0
        %v1124 = vadd.f32 %v945, %v1123
        %v1125 = vpop.f32.mrf.mxu0
        %v1126 = vadd.f32 %v949, %v1125
        %1127 = vmatprep.mubr.bf16.mxu0 0
        %1128 = vmatmul.mubr.bf16.gmra.mxu0 %v893
        %v1129 = vpop.f32.mrf.mxu0
        %v1130 = vadd.f32 %v945, %v1129
        %v1131 = vpop.f32.mrf.mxu0
        %v1132 = vadd.f32 %v949, %v1131
        %v1133 = vpop.f32.mrf.mxu0
        %v1134 = vadd.f32 %v945, %v1133
        %v1135 = vpop.f32.mrf.mxu0
        %v1136 = vadd.f32 %v949, %v1135
        %1137 = vmatprep.mubr.bf16.mxu0 0
        %1138 = vmatmul.mubr.bf16.gmra.mxu0 %v894
        %v1139 = vpop.f32.mrf.mxu0
        %v1140 = vadd.f32 %v945, %v1139
        %v1141 = vpop.f32.mrf.mxu0
        %v1142 = vadd.f32 %v949, %v1141
        %v1143 = vpop.f32.mrf.mxu0
        %v1144 = vadd.f32 %v945, %v1143
        %v1145 = vpop.f32.mrf.mxu0
        %v1146 = vadd.f32 %v949, %v1145
        %1147 = vmatprep.mubr.bf16.mxu0 0
        %1148 = vmatmul.mubr.bf16.gmra.mxu0 %v895
        %v1149 = vpop.f32.mrf.mxu0
        %v1150 = vadd.f32 %v945, %v1149
        %v1151 = vpop.f32.mrf.mxu0
        %v1152 = vadd.f32 %v949, %v1151
        %v1153 = vpop.f32.mrf.mxu0
        %v1154 = vadd.f32 %v945, %v1153
        %v1155 = vpop.f32.mrf.mxu0
        %v1156 = vadd.f32 %v949, %v1155
        %1157 = vmatprep.mubr.bf16.mxu0 0
        %1158 = vmatmul.mubr.bf16.gmra.mxu0 %v896
        %v1159 = vpop.f32.mrf.mxu0
        %v1160 = vadd.f32 %v945, %v1159
        %v1161 = vpop.f32.mrf.mxu0
        %v1162 = vadd.f32 %v949, %v1161
        %v1163 = vpop.f32.mrf.mxu0
        %v1164 = vadd.f32 %v945, %v1163
        %v1165 = vpop.f32.mrf.mxu0
        %v1166 = vadd.f32 %v949, %v1165
        %1167 = vmatprep.mubr.bf16.mxu0 0
        %1168 = vmatmul.mubr.bf16.gmra.mxu0 %v897
        %v1169 = vpop.f32.mrf.mxu0
        %v1170 = vadd.f32 %v945, %v1169
        %v1171 = vpop.f32.mrf.mxu0
        %v1172 = vadd.f32 %v949, %v1171
        %v1173 = vpop.f32.mrf.mxu0
        %v1174 = vadd.f32 %v945, %v1173
        %v1175 = vpop.f32.mrf.mxu0
        %v1176 = vadd.f32 %v949, %v1175
        %1177 = vmatprep.mubr.bf16.mxu0 0
        %1178 = vmatmul.mubr.bf16.gmra.mxu0 %v898
        %v1179 = vpop.f32.mrf.mxu0
        %v1180 = vadd.f32 %v945, %v1179
        %v1181 = vpop.f32.mrf.mxu0
        %v1182 = vadd.f32 %v949, %v1181
        %v1183 = vpop.f32.mrf.mxu0
        %v1184 = vadd.f32 %v945, %v1183
        %v1185 = vpop.f32.mrf.mxu0
        %v1186 = vadd.f32 %v949, %v1185
        %1187 = vmatprep.mubr.bf16.mxu0 0
        %1188 = vmatmul.mubr.bf16.gmra.mxu0 %v899
        %v1189 = vpop.f32.mrf.mxu0
        %v1190 = vadd.f32 %v945, %v1189
        %v1191 = vpop.f32.mrf.mxu0
        %v1192 = vadd.f32 %v949, %v1191
        %v1193 = vpop.f32.mrf.mxu0
        %v1194 = vadd.f32 %v945, %v1193
        %v1195 = vpop.f32.mrf.mxu0
        %v1196 = vadd.f32 %v949, %v1195
        %1197 = vmatprep.mubr.bf16.mxu0 0
        %1198 = vmatmul.mubr.bf16.gmra.mxu0 %v900
        %v1199 = vpop.f32.mrf.mxu0
        %v1200 = vadd.f32 %v945, %v1199
        %v1201 = vpop.f32.mrf.mxu0
        %v1202 = vadd.f32 %v949, %v1201
        %v1203 = vpop.f32.mrf.mxu0
        %v1204 = vadd.f32 %v945, %v1203
        %v1205 = vpop.f32.mrf.mxu0
        %v1206 = vadd.f32 %v949, %v1205
        %1207 = vmatprep.mubr.bf16.mxu0 0
        %1208 = vmatmul.mubr.bf16.gmra.mxu0 %v901
        %v1209 = vpop.f32.mrf.mxu0
        %v1210 = vadd.f32 %v945, %v1209
        %v1211 = vpop.f32.mrf.mxu0
        %v1212 = vadd.f32 %v949, %v1211
        %v1213 = vpop.f32.mrf.mxu0
        %v1214 = vadd.f32 %v945, %v1213
        %v1215 = vpop.f32.mrf.mxu0
        %v1216 = vadd.f32 %v949, %v1215
        %1217 = vmatprep.mubr.bf16.mxu0 0
        %1218 = vmatmul.mubr.bf16.gmra.mxu0 %v902
        %v1219 = vpop.f32.mrf.mxu0
        %v1220 = vadd.f32 %v945, %v1219
        %v1221 = vpop.f32.mrf.mxu0
        %v1222 = vadd.f32 %v949, %v1221
        %v1223 = vpop.f32.mrf.mxu0
        %v1224 = vadd.f32 %v945, %v1223
        %v1225 = vpop.f32.mrf.mxu0
        %v1226 = vadd.f32 %v949, %v1225
        %1227 = vmatprep.mubr.bf16.mxu0 0
        %1228 = vmatmul.mubr.bf16.gmra.mxu0 %v903
        %v1229 = vpop.f32.mrf.mxu0
        %v1230 = vadd.f32 %v945, %v1229
        %v1231 = vpop.f32.mrf.mxu0
        %v1232 = vadd.f32 %v949, %v1231
        %v1233 = vpop.f32.mrf.mxu0
        %v1234 = vadd.f32 %v945, %v1233
        %v1235 = vpop.f32.mrf.mxu0
        %v1236 = vadd.f32 %v949, %v1235
        %1237 = vmatprep.mubr.bf16.mxu0 0
        %1238 = vmatmul.mubr.bf16.gmra.mxu0 %v904
        %v1239 = vpop.f32.mrf.mxu0
        %v1240 = vadd.f32 %v945, %v1239
        %v1241 = vpop.f32.mrf.mxu0
        %v1242 = vadd.f32 %v949, %v1241
        %v1243 = vpop.f32.mrf.mxu0
        %v1244 = vadd.f32 %v945, %v1243
        %v1245 = vpop.f32.mrf.mxu0
        %v1246 = vadd.f32 %v949, %v1245
        %1247 = vmatprep.mubr.bf16.mxu0 0
        %1248 = vmatmul.mubr.bf16.gmra.mxu0 %v905
        %v1249 = vpop.f32.mrf.mxu0
        %v1250 = vadd.f32 %v945, %v1249
        %v1251 = vpop.f32.mrf.mxu0
        %v1252 = vadd.f32 %v949, %v1251
        %v1253 = vpop.f32.mrf.mxu0
        %v1254 = vadd.f32 %v945, %v1253
        %v1255 = vpop.f32.mrf.mxu0
        %v1256 = vadd.f32 %v949, %v1255
        %1257 = vmatprep.mubr.bf16.mxu0 0
        %1258 = vmatmul.mubr.bf16.gmra.mxu0 %v906
        %v1259 = vpop.f32.mrf.mxu0
        %v1260 = vadd.f32 %v945, %v1259
        %v1261 = vpop.f32.mrf.mxu0
        %v1262 = vadd.f32 %v949, %v1261
        %v1263 = vpop.f32.mrf.mxu0
        %v1264 = vadd.f32 %v945, %v1263
        %v1265 = vpop.f32.mrf.mxu0
        %v1266 = vadd.f32 %v949, %v1265
        %1267 = vmatprep.mubr.bf16.mxu0 0
        %1268 = vmatmul.mubr.bf16.gmra.mxu0 %v907
        %v1269 = vpop.f32.mrf.mxu0
        %v1270 = vadd.f32 %v945, %v1269
        %v1271 = vpop.f32.mrf.mxu0
        %v1272 = vadd.f32 %v949, %v1271
        %v1273 = vpop.f32.mrf.mxu0
        %v1274 = vadd.f32 %v945, %v1273
        %v1275 = vpop.f32.mrf.mxu0
        %v1276 = vadd.f32 %v949, %v1275
        %1277 = vdwg.mxu0
        %1278 = vmatprep.subr.bf16.mxu0 0
        %1279 = vmatpush1.bf16.msra.mxu0 %v1060
        %1280 = vmatprep.subr.bf16.mxu0 0
        %1281 = vmatpush1.bf16.msra.mxu0 %v1057
        %1282 = vmatprep.subr.bf16.mxu0 0
        %1283 = vmatpush1.bf16.msra.mxu0 %v1054
        %1284 = vmatprep.subr.bf16.mxu0 0
        %1285 = vmatpush1.bf16.msra.mxu0 %v1051
        %1286 = vmatprep.subr.bf16.mxu0 0
        %1287 = vmatpush1.bf16.msra.mxu0 %v1048
        %1288 = vmatprep.subr.bf16.mxu0 0
        %1289 = vmatpush1.bf16.msra.mxu0 %v1045
        %1290 = vmatprep.subr.bf16.mxu0 0
        %1291 = vmatpush1.bf16.msra.mxu0 %v1042
        %1292 = vmatprep.subr.bf16.mxu0 0
        %1293 = vmatpush1.bf16.msra.mxu0 %v1039
        %1294 = vmatprep.subr.bf16.mxu0 0
        %1295 = vmatpush2.bf16.msra.mxu0 0
        %1296 = vmatprep.subr.bf16.mxu0 0
        %1297 = vmatpush2.bf16.msra.mxu0 0
        %1298 = vmatprep.subr.bf16.mxu0 0
        %1299 = vmatpush2.bf16.msra.mxu0 0
        %1300 = vmatprep.subr.bf16.mxu0 0
        %1301 = vmatpush2.bf16.msra.mxu0 0
        %1302 = vmatprep.subr.bf16.mxu0 0
        %1303 = vmatpush2.bf16.msra.mxu0 0
        %1304 = vmatprep.subr.bf16.mxu0 0
        %1305 = vmatpush2.bf16.msra.mxu0 0
        %1306 = vmatprep.subr.bf16.mxu0 0
        %1307 = vmatpush2.bf16.msra.mxu0 0
        %1308 = vmatprep.subr.bf16.mxu0 0
        %1309 = vmatpush2.bf16.msra.mxu0 0
        %1310 = vmatprep.mubr.bf16.mxu0 0
        %1311 = vmatmul.mubr.bf16.gmra.mxu0 %v892
        %v1312 = vpop.f32.mrf.mxu0
        %v1313 = vadd.f32 %v953, %v1312
        %v1314 = vpop.f32.mrf.mxu0
        %v1315 = vpop.f32.mrf.mxu0
        %v1316 = vadd.f32 %v953, %v1315
        %v1317 = vpop.f32.mrf.mxu0
        %1318 = vmatprep.mubr.bf16.mxu0 0
        %1319 = vmatmul.mubr.bf16.gmra.mxu0 %v893
        %v1320 = vpop.f32.mrf.mxu0
        %v1321 = vadd.f32 %v953, %v1320
        %v1322 = vpop.f32.mrf.mxu0
        %v1323 = vpop.f32.mrf.mxu0
        %v1324 = vadd.f32 %v953, %v1323
        %v1325 = vpop.f32.mrf.mxu0
        %1326 = vmatprep.mubr.bf16.mxu0 0
        %1327 = vmatmul.mubr.bf16.gmra.mxu0 %v894
        %v1328 = vpop.f32.mrf.mxu0
        %v1329 = vadd.f32 %v953, %v1328
        %v1330 = vpop.f32.mrf.mxu0
        %v1331 = vpop.f32.mrf.mxu0
        %v1332 = vadd.f32 %v953, %v1331
        %v1333 = vpop.f32.mrf.mxu0
        %1334 = vmatprep.mubr.bf16.mxu0 0
        %1335 = vmatmul.mubr.bf16.gmra.mxu0 %v895
        %v1336 = vpop.f32.mrf.mxu0
        %v1337 = vadd.f32 %v953, %v1336
        %v1338 = vpop.f32.mrf.mxu0
        %v1339 = vpop.f32.mrf.mxu0
        %v1340 = vadd.f32 %v953, %v1339
        %v1341 = vpop.f32.mrf.mxu0
        %1342 = vmatprep.mubr.bf16.mxu0 0
        %1343 = vmatmul.mubr.bf16.gmra.mxu0 %v896
        %v1344 = vpop.f32.mrf.mxu0
        %v1345 = vadd.f32 %v953, %v1344
        %v1346 = vpop.f32.mrf.mxu0
        %v1347 = vpop.f32.mrf.mxu0
        %v1348 = vadd.f32 %v953, %v1347
        %v1349 = vpop.f32.mrf.mxu0
        %1350 = vmatprep.mubr.bf16.mxu0 0
        %1351 = vmatmul.mubr.bf16.gmra.mxu0 %v897
        %v1352 = vpop.f32.mrf.mxu0
        %v1353 = vadd.f32 %v953, %v1352
        %v1354 = vpop.f32.mrf.mxu0
        %v1355 = vpop.f32.mrf.mxu0
        %v1356 = vadd.f32 %v953, %v1355
        %v1357 = vpop.f32.mrf.mxu0
        %1358 = vmatprep.mubr.bf16.mxu0 0
        %1359 = vmatmul.mubr.bf16.gmra.mxu0 %v898
        %v1360 = vpop.f32.mrf.mxu0
        %v1361 = vadd.f32 %v953, %v1360
        %v1362 = vpop.f32.mrf.mxu0
        %v1363 = vpop.f32.mrf.mxu0
        %v1364 = vadd.f32 %v953, %v1363
        %v1365 = vpop.f32.mrf.mxu0
        %1366 = vmatprep.mubr.bf16.mxu0 0
        %1367 = vmatmul.mubr.bf16.gmra.mxu0 %v899
        %v1368 = vpop.f32.mrf.mxu0
        %v1369 = vadd.f32 %v953, %v1368
        %v1370 = vpop.f32.mrf.mxu0
        %v1371 = vpop.f32.mrf.mxu0
        %v1372 = vadd.f32 %v953, %v1371
        %v1373 = vpop.f32.mrf.mxu0
        %1374 = vmatprep.mubr.bf16.mxu0 0
        %1375 = vmatmul.mubr.bf16.gmra.mxu0 %v900
        %v1376 = vpop.f32.mrf.mxu0
        %v1377 = vadd.f32 %v953, %v1376
        %v1378 = vpop.f32.mrf.mxu0
        %v1379 = vpop.f32.mrf.mxu0
        %v1380 = vadd.f32 %v953, %v1379
        %v1381 = vpop.f32.mrf.mxu0
        %1382 = vmatprep.mubr.bf16.mxu0 0
        %1383 = vmatmul.mubr.bf16.gmra.mxu0 %v901
        %v1384 = vpop.f32.mrf.mxu0
        %v1385 = vadd.f32 %v953, %v1384
        %v1386 = vpop.f32.mrf.mxu0
        %v1387 = vpop.f32.mrf.mxu0
        %v1388 = vadd.f32 %v953, %v1387
        %v1389 = vpop.f32.mrf.mxu0
        %1390 = vmatprep.mubr.bf16.mxu0 0
        %1391 = vmatmul.mubr.bf16.gmra.mxu0 %v902
        %v1392 = vpop.f32.mrf.mxu0
        %v1393 = vadd.f32 %v953, %v1392
        %v1394 = vpop.f32.mrf.mxu0
        %v1395 = vpop.f32.mrf.mxu0
        %v1396 = vadd.f32 %v953, %v1395
        %v1397 = vpop.f32.mrf.mxu0
        %1398 = vmatprep.mubr.bf16.mxu0 0
        %1399 = vmatmul.mubr.bf16.gmra.mxu0 %v903
        %v1400 = vpop.f32.mrf.mxu0
        %v1401 = vadd.f32 %v953, %v1400
        %v1402 = vpop.f32.mrf.mxu0
        %v1403 = vpop.f32.mrf.mxu0
        %v1404 = vadd.f32 %v953, %v1403
        %v1405 = vpop.f32.mrf.mxu0
        %1406 = vmatprep.mubr.bf16.mxu0 0
        %1407 = vmatmul.mubr.bf16.gmra.mxu0 %v904
        %v1408 = vpop.f32.mrf.mxu0
        %v1409 = vadd.f32 %v953, %v1408
        %v1410 = vpop.f32.mrf.mxu0
        %v1411 = vpop.f32.mrf.mxu0
        %v1412 = vadd.f32 %v953, %v1411
        %v1413 = vpop.f32.mrf.mxu0
        %1414 = vmatprep.mubr.bf16.mxu0 0
        %1415 = vmatmul.mubr.bf16.gmra.mxu0 %v905
        %v1416 = vpop.f32.mrf.mxu0
        %v1417 = vadd.f32 %v953, %v1416
        %v1418 = vpop.f32.mrf.mxu0
        %v1419 = vpop.f32.mrf.mxu0
        %v1420 = vadd.f32 %v953, %v1419
        %v1421 = vpop.f32.mrf.mxu0
        %1422 = vmatprep.mubr.bf16.mxu0 0
        %1423 = vmatmul.mubr.bf16.gmra.mxu0 %v906
        %v1424 = vpop.f32.mrf.mxu0
        %v1425 = vadd.f32 %v953, %v1424
        %v1426 = vpop.f32.mrf.mxu0
        %v1427 = vpop.f32.mrf.mxu0
        %v1428 = vadd.f32 %v953, %v1427
        %v1429 = vpop.f32.mrf.mxu0
        %1430 = vmatprep.mubr.bf16.mxu0 0
        %1431 = vmatmul.mubr.bf16.gmra.mxu0 %v907
        %v1432 = vpop.f32.mrf.mxu0
        %v1433 = vadd.f32 %v953, %v1432
        %v1434 = vpop.f32.mrf.mxu0
        %v1435 = vpop.f32.mrf.mxu0
        %v1436 = vadd.f32 %v953, %v1435
        %v1437 = vpop.f32.mrf.mxu0
        %1438 = vdwg.mxu0
        %v1439 = vmul.f32 %v1120, 0.17677669
        %v1440 = vmul.f32 %v1124, 0.17677669
        %v1441 = vmul.f32 %v1130, 0.17677669
        %v1442 = vmul.f32 %v1134, 0.17677669
        %v1443 = vmul.f32 %v1140, 0.17677669
        %v1444 = vmul.f32 %v1144, 0.17677669
        %v1445 = vmul.f32 %v1150, 0.17677669
        %v1446 = vmul.f32 %v1154, 0.17677669
        %v1447 = vmul.f32 %v1160, 0.17677669
        %v1448 = vmul.f32 %v1164, 0.17677669
        %v1449 = vmul.f32 %v1170, 0.17677669
        %v1450 = vmul.f32 %v1174, 0.17677669
        %v1451 = vmul.f32 %v1180, 0.17677669
        %v1452 = vmul.f32 %v1184, 0.17677669
        %v1453 = vmul.f32 %v1190, 0.17677669
        %v1454 = vmul.f32 %v1194, 0.17677669
        %v1455 = vmul.f32 %v1200, 0.17677669
        %v1456 = vmul.f32 %v1204, 0.17677669
        %v1457 = vmul.f32 %v1210, 0.17677669
        %v1458 = vmul.f32 %v1214, 0.17677669
        %v1459 = vmul.f32 %v1220, 0.17677669
        %v1460 = vmul.f32 %v1224, 0.17677669
        %v1461 = vmul.f32 %v1230, 0.17677669
        %v1462 = vmul.f32 %v1234, 0.17677669
        %v1463 = vmul.f32 %v1240, 0.17677669
        %v1464 = vmul.f32 %v1244, 0.17677669
        %v1465 = vmul.f32 %v1250, 0.17677669
        %v1466 = vmul.f32 %v1254, 0.17677669
        %v1467 = vmul.f32 %v1260, 0.17677669
        %v1468 = vmul.f32 %v1264, 0.17677669
        %v1469 = vmul.f32 %v1270, 0.17677669
        %v1470 = vmul.f32 %v1274, 0.17677669
        %v1471 = vpack.c.bf16 %v1440, %v1439
        %v1472 = vpack.c.bf16 %v1442, %v1441
        %v1473 = vpack.c.bf16 %v1444, %v1443
        %v1474 = vpack.c.bf16 %v1446, %v1445
        %v1475 = vpack.c.bf16 %v1448, %v1447
        %v1476 = vpack.c.bf16 %v1450, %v1449
        %v1477 = vpack.c.bf16 %v1452, %v1451
        %v1478 = vpack.c.bf16 %v1454, %v1453
        %v1479 = vpack.c.bf16 %v1456, %v1455
        %v1480 = vpack.c.bf16 %v1458, %v1457
        %v1481 = vpack.c.bf16 %v1460, %v1459
        %v1482 = vpack.c.bf16 %v1462, %v1461
        %v1483 = vpack.c.bf16 %v1464, %v1463
        %v1484 = vpack.c.bf16 %v1466, %v1465
        %v1485 = vpack.c.bf16 %v1468, %v1467
        %v1486 = vpack.c.bf16 %v1470, %v1469
        %v1487 = vpack.c.bf16 %v1126, %v1122
        %v1488 = vpack.c.bf16 %v1136, %v1132
        %v1489 = vpack.c.bf16 %v1146, %v1142
        %v1490 = vpack.c.bf16 %v1156, %v1152
        %v1491 = vpack.c.bf16 %v1166, %v1162
        %v1492 = vpack.c.bf16 %v1176, %v1172
        %v1493 = vpack.c.bf16 %v1186, %v1182
        %v1494 = vpack.c.bf16 %v1196, %v1192
        %v1495 = vpack.c.bf16 %v1206, %v1202
        %v1496 = vpack.c.bf16 %v1216, %v1212
        %v1497 = vpack.c.bf16 %v1226, %v1222
        %v1498 = vpack.c.bf16 %v1236, %v1232
        %v1499 = vpack.c.bf16 %v1246, %v1242
        %v1500 = vpack.c.bf16 %v1256, %v1252
        %v1501 = vpack.c.bf16 %v1266, %v1262
        %v1502 = vpack.c.bf16 %v1276, %v1272
        %1503 = vmatprep.subr.bf16.mxu0 0
        %1504 = vmatpush1.bf16.xpose.msra.mxu0 %v1494
        %1505 = vmatprep.subr.bf16.mxu0 0
        %1506 = vmatpush1.bf16.xpose.msra.mxu0 %v1493
        %1507 = vmatprep.subr.bf16.mxu0 0
        %1508 = vmatpush1.bf16.xpose.msra.mxu0 %v1492
        %1509 = vmatprep.subr.bf16.mxu0 0
        %1510 = vmatpush1.bf16.xpose.msra.mxu0 %v1491
        %1511 = vmatprep.subr.bf16.mxu0 0
        %1512 = vmatpush1.bf16.xpose.msra.mxu0 %v1490
        %1513 = vmatprep.subr.bf16.mxu0 0
        %1514 = vmatpush1.bf16.xpose.msra.mxu0 %v1489
        %1515 = vmatprep.subr.bf16.mxu0 0
        %1516 = vmatpush1.bf16.xpose.msra.mxu0 %v1488
        %1517 = vmatprep.subr.bf16.mxu0 0
        %1518 = vmatpush1.bf16.xpose.msra.mxu0 %v1487
        %1519 = vmatprep.subr.bf16.mxu0 0
        %1520 = vmatpush2.bf16.xpose.msra.mxu0 %v1502
        %1521 = vmatprep.subr.bf16.mxu0 0
        %1522 = vmatpush2.bf16.xpose.msra.mxu0 %v1501
        %1523 = vmatprep.subr.bf16.mxu0 0
        %1524 = vmatpush2.bf16.xpose.msra.mxu0 %v1500
        %1525 = vmatprep.subr.bf16.mxu0 0
        %1526 = vmatpush2.bf16.xpose.msra.mxu0 %v1499
        %1527 = vmatprep.subr.bf16.mxu0 0
        %1528 = vmatpush2.bf16.xpose.msra.mxu0 %v1498
        %1529 = vmatprep.subr.bf16.mxu0 0
        %1530 = vmatpush2.bf16.xpose.msra.mxu0 %v1497
        %1531 = vmatprep.subr.bf16.mxu0 0
        %1532 = vmatpush2.bf16.xpose.msra.mxu0 %v1496
        %1533 = vmatprep.subr.bf16.mxu0 0
        %1534 = vmatpush2.bf16.xpose.msra.mxu0 %v1495
        %1535 = vmatprep.mubr.bf16.mxu0 0
        %1536 = vmatmul.mubr.bf16.gmra.mxu0 %v1471
        %v1537 = vpop.f32.mrf.mxu0
        %v1538 = vadd.f32 0.0, %v1537
        %v1539 = vpop.f32.mrf.mxu0
        %v1540 = vadd.f32 0.0, %v1539
        %v1541 = vpop.f32.mrf.mxu0
        %v1542 = vadd.f32 0.0, %v1541
        %v1543 = vpop.f32.mrf.mxu0
        %v1544 = vadd.f32 0.0, %v1543
        %1545 = vmatprep.mubr.bf16.mxu0 0
        %1546 = vmatmul.mubr.bf16.gmra.mxu0 %v1472
        %v1547 = vpop.f32.mrf.mxu0
        %v1548 = vadd.f32 0.0, %v1547
        %v1549 = vpop.f32.mrf.mxu0
        %v1550 = vadd.f32 0.0, %v1549
        %v1551 = vpop.f32.mrf.mxu0
        %v1552 = vadd.f32 0.0, %v1551
        %v1553 = vpop.f32.mrf.mxu0
        %v1554 = vadd.f32 0.0, %v1553
        %1555 = vmatprep.mubr.bf16.mxu0 0
        %1556 = vmatmul.mubr.bf16.gmra.mxu0 %v1473
        %v1557 = vpop.f32.mrf.mxu0
        %v1558 = vadd.f32 0.0, %v1557
        %v1559 = vpop.f32.mrf.mxu0
        %v1560 = vadd.f32 0.0, %v1559
        %v1561 = vpop.f32.mrf.mxu0
        %v1562 = vadd.f32 0.0, %v1561
        %v1563 = vpop.f32.mrf.mxu0
        %v1564 = vadd.f32 0.0, %v1563
        %1565 = vmatprep.mubr.bf16.mxu0 0
        %1566 = vmatmul.mubr.bf16.gmra.mxu0 %v1474
        %v1567 = vpop.f32.mrf.mxu0
        %v1568 = vadd.f32 0.0, %v1567
        %v1569 = vpop.f32.mrf.mxu0
        %v1570 = vadd.f32 0.0, %v1569
        %v1571 = vpop.f32.mrf.mxu0
        %v1572 = vadd.f32 0.0, %v1571
        %v1573 = vpop.f32.mrf.mxu0
        %v1574 = vadd.f32 0.0, %v1573
        %1575 = vmatprep.mubr.bf16.mxu0 0
        %1576 = vmatmul.mubr.bf16.gmra.mxu0 %v1475
        %v1577 = vpop.f32.mrf.mxu0
        %v1578 = vadd.f32 0.0, %v1577
        %v1579 = vpop.f32.mrf.mxu0
        %v1580 = vadd.f32 0.0, %v1579
        %v1581 = vpop.f32.mrf.mxu0
        %v1582 = vadd.f32 0.0, %v1581
        %v1583 = vpop.f32.mrf.mxu0
        %v1584 = vadd.f32 0.0, %v1583
        %1585 = vmatprep.mubr.bf16.mxu0 0
        %1586 = vmatmul.mubr.bf16.gmra.mxu0 %v1476
        %v1587 = vpop.f32.mrf.mxu0
        %v1588 = vadd.f32 0.0, %v1587
        %v1589 = vpop.f32.mrf.mxu0
        %v1590 = vadd.f32 0.0, %v1589
        %v1591 = vpop.f32.mrf.mxu0
        %v1592 = vadd.f32 0.0, %v1591
        %v1593 = vpop.f32.mrf.mxu0
        %v1594 = vadd.f32 0.0, %v1593
        %1595 = vmatprep.mubr.bf16.mxu0 0
        %1596 = vmatmul.mubr.bf16.gmra.mxu0 %v1477
        %v1597 = vpop.f32.mrf.mxu0
        %v1598 = vadd.f32 0.0, %v1597
        %v1599 = vpop.f32.mrf.mxu0
        %v1600 = vadd.f32 0.0, %v1599
        %v1601 = vpop.f32.mrf.mxu0
        %v1602 = vadd.f32 0.0, %v1601
        %v1603 = vpop.f32.mrf.mxu0
        %v1604 = vadd.f32 0.0, %v1603
        %1605 = vmatprep.mubr.bf16.mxu0 0
        %1606 = vmatmul.mubr.bf16.gmra.mxu0 %v1478
        %v1607 = vpop.f32.mrf.mxu0
        %v1608 = vadd.f32 0.0, %v1607
        %v1609 = vpop.f32.mrf.mxu0
        %v1610 = vadd.f32 0.0, %v1609
        %v1611 = vpop.f32.mrf.mxu0
        %v1612 = vadd.f32 0.0, %v1611
        %v1613 = vpop.f32.mrf.mxu0
        %v1614 = vadd.f32 0.0, %v1613
        %1615 = vmatprep.mubr.bf16.mxu0 0
        %1616 = vmatmul.mubr.bf16.gmra.mxu0 %v1479
        %v1617 = vpop.f32.mrf.mxu0
        %v1618 = vadd.f32 0.0, %v1617
        %v1619 = vpop.f32.mrf.mxu0
        %v1620 = vadd.f32 0.0, %v1619
        %v1621 = vpop.f32.mrf.mxu0
        %v1622 = vadd.f32 0.0, %v1621
        %v1623 = vpop.f32.mrf.mxu0
        %v1624 = vadd.f32 0.0, %v1623
        %1625 = vmatprep.mubr.bf16.mxu0 0
        %1626 = vmatmul.mubr.bf16.gmra.mxu0 %v1480
        %v1627 = vpop.f32.mrf.mxu0
        %v1628 = vadd.f32 0.0, %v1627
        %v1629 = vpop.f32.mrf.mxu0
        %v1630 = vadd.f32 0.0, %v1629
        %v1631 = vpop.f32.mrf.mxu0
        %v1632 = vadd.f32 0.0, %v1631
        %v1633 = vpop.f32.mrf.mxu0
        %v1634 = vadd.f32 0.0, %v1633
        %1635 = vmatprep.mubr.bf16.mxu0 0
        %1636 = vmatmul.mubr.bf16.gmra.mxu0 %v1481
        %v1637 = vpop.f32.mrf.mxu0
        %v1638 = vadd.f32 0.0, %v1637
        %v1639 = vpop.f32.mrf.mxu0
        %v1640 = vadd.f32 0.0, %v1639
        %v1641 = vpop.f32.mrf.mxu0
        %v1642 = vadd.f32 0.0, %v1641
        %v1643 = vpop.f32.mrf.mxu0
        %v1644 = vadd.f32 0.0, %v1643
        %1645 = vmatprep.mubr.bf16.mxu0 0
        %1646 = vmatmul.mubr.bf16.gmra.mxu0 %v1482
        %v1647 = vpop.f32.mrf.mxu0
        %v1648 = vadd.f32 0.0, %v1647
        %v1649 = vpop.f32.mrf.mxu0
        %v1650 = vadd.f32 0.0, %v1649
        %v1651 = vpop.f32.mrf.mxu0
        %v1652 = vadd.f32 0.0, %v1651
        %v1653 = vpop.f32.mrf.mxu0
        %v1654 = vadd.f32 0.0, %v1653
        %1655 = vmatprep.mubr.bf16.mxu0 0
        %1656 = vmatmul.mubr.bf16.gmra.mxu0 %v1483
        %v1657 = vpop.f32.mrf.mxu0
        %v1658 = vadd.f32 0.0, %v1657
        %v1659 = vpop.f32.mrf.mxu0
        %v1660 = vadd.f32 0.0, %v1659
        %v1661 = vpop.f32.mrf.mxu0
        %v1662 = vadd.f32 0.0, %v1661
        %v1663 = vpop.f32.mrf.mxu0
        %v1664 = vadd.f32 0.0, %v1663
        %1665 = vmatprep.mubr.bf16.mxu0 0
        %1666 = vmatmul.mubr.bf16.gmra.mxu0 %v1484
        %v1667 = vpop.f32.mrf.mxu0
        %v1668 = vadd.f32 0.0, %v1667
        %v1669 = vpop.f32.mrf.mxu0
        %v1670 = vadd.f32 0.0, %v1669
        %v1671 = vpop.f32.mrf.mxu0
        %v1672 = vadd.f32 0.0, %v1671
        %v1673 = vpop.f32.mrf.mxu0
        %v1674 = vadd.f32 0.0, %v1673
        %1675 = vmatprep.mubr.bf16.mxu0 0
        %1676 = vmatmul.mubr.bf16.gmra.mxu0 %v1485
        %v1677 = vpop.f32.mrf.mxu0
        %v1678 = vadd.f32 0.0, %v1677
        %v1679 = vpop.f32.mrf.mxu0
        %v1680 = vadd.f32 0.0, %v1679
        %v1681 = vpop.f32.mrf.mxu0
        %v1682 = vadd.f32 0.0, %v1681
        %v1683 = vpop.f32.mrf.mxu0
        %v1684 = vadd.f32 0.0, %v1683
        %1685 = vmatprep.mubr.bf16.mxu0 0
        %1686 = vmatmul.mubr.bf16.gmra.mxu0 %v1486
        %v1687 = vpop.f32.mrf.mxu0
        %v1688 = vadd.f32 0.0, %v1687
        %v1689 = vpop.f32.mrf.mxu0
        %v1690 = vadd.f32 0.0, %v1689
        %v1691 = vpop.f32.mrf.mxu0
        %v1692 = vadd.f32 0.0, %v1691
        %v1693 = vpop.f32.mrf.mxu0
        %v1694 = vadd.f32 0.0, %v1693
        %1695 = vdwg.mxu0
        %v1696 = vmax.f32 %v1538, %v1540
        %1697 = vmax.xlane.f32.xlu0 %v1696
        %v1698 = vpop.xlane.xlu0 %1697
        %v1699 = vmax.f32 %v1542, %v1544
        %1700 = vmax.xlane.f32.xlu0 %v1699
        %v1701 = vpop.xlane.xlu0 %1700
        %v1702 = vmax.f32 %v1548, %v1550
        %1703 = vmax.xlane.f32.xlu0 %v1702
        %v1704 = vpop.xlane.xlu0 %1703
        %v1705 = vmax.f32 %v1552, %v1554
        %1706 = vmax.xlane.f32.xlu0 %v1705
        %v1707 = vpop.xlane.xlu0 %1706
        %v1708 = vmax.f32 %v1558, %v1560
        %1709 = vmax.xlane.f32.xlu0 %v1708
        %v1710 = vpop.xlane.xlu0 %1709
        %v1711 = vmax.f32 %v1562, %v1564
        %1712 = vmax.xlane.f32.xlu0 %v1711
        %v1713 = vpop.xlane.xlu0 %1712
        %v1714 = vmax.f32 %v1568, %v1570
        %1715 = vmax.xlane.f32.xlu0 %v1714
        %v1716 = vpop.xlane.xlu0 %1715
        %v1717 = vmax.f32 %v1572, %v1574
        %1718 = vmax.xlane.f32.xlu0 %v1717
        %v1719 = vpop.xlane.xlu0 %1718
        %v1720 = vmax.f32 %v1578, %v1580
        %1721 = vmax.xlane.f32.xlu0 %v1720
        %v1722 = vpop.xlane.xlu0 %1721
        %v1723 = vmax.f32 %v1582, %v1584
        %1724 = vmax.xlane.f32.xlu0 %v1723
        %v1725 = vpop.xlane.xlu0 %1724
        %v1726 = vmax.f32 %v1588, %v1590
        %1727 = vmax.xlane.f32.xlu0 %v1726
        %v1728 = vpop.xlane.xlu0 %1727
        %v1729 = vmax.f32 %v1592, %v1594
        %1730 = vmax.xlane.f32.xlu0 %v1729
        %v1731 = vpop.xlane.xlu0 %1730
        %v1732 = vmax.f32 %v1598, %v1600
        %1733 = vmax.xlane.f32.xlu0 %v1732
        %v1734 = vpop.xlane.xlu0 %1733
        %v1735 = vmax.f32 %v1602, %v1604
        %1736 = vmax.xlane.f32.xlu0 %v1735
        %v1737 = vpop.xlane.xlu0 %1736
        %v1738 = vmax.f32 %v1608, %v1610
        %1739 = vmax.xlane.f32.xlu0 %v1738
        %v1740 = vpop.xlane.xlu0 %1739
        %v1741 = vmax.f32 %v1612, %v1614
        %1742 = vmax.xlane.f32.xlu0 %v1741
        %v1743 = vpop.xlane.xlu0 %1742
        %v1744 = vmax.f32 %v1618, %v1620
        %1745 = vmax.xlane.f32.xlu0 %v1744
        %v1746 = vpop.xlane.xlu0 %1745
        %v1747 = vmax.f32 %v1622, %v1624
        %1748 = vmax.xlane.f32.xlu0 %v1747
        %v1749 = vpop.xlane.xlu0 %1748
        %v1750 = vmax.f32 %v1628, %v1630
        %1751 = vmax.xlane.f32.xlu0 %v1750
        %v1752 = vpop.xlane.xlu0 %1751
        %v1753 = vmax.f32 %v1632, %v1634
        %1754 = vmax.xlane.f32.xlu0 %v1753
        %v1755 = vpop.xlane.xlu0 %1754
        %v1756 = vmax.f32 %v1638, %v1640
        %1757 = vmax.xlane.f32.xlu0 %v1756
        %v1758 = vpop.xlane.xlu0 %1757
        %v1759 = vmax.f32 %v1642, %v1644
        %1760 = vmax.xlane.f32.xlu0 %v1759
        %v1761 = vpop.xlane.xlu0 %1760
        %v1762 = vmax.f32 %v1648, %v1650
        %1763 = vmax.xlane.f32.xlu0 %v1762
        %v1764 = vpop.xlane.xlu0 %1763
        %v1765 = vmax.f32 %v1652, %v1654
        %1766 = vmax.xlane.f32.xlu0 %v1765
        %v1767 = vpop.xlane.xlu0 %1766
        %v1768 = vmax.f32 %v1658, %v1660
        %1769 = vmax.xlane.f32.xlu0 %v1768
        %v1770 = vpop.xlane.xlu0 %1769
        %v1771 = vmax.f32 %v1662, %v1664
        %1772 = vmax.xlane.f32.xlu0 %v1771
        %v1773 = vpop.xlane.xlu0 %1772
        %v1774 = vmax.f32 %v1668, %v1670
        %1775 = vmax.xlane.f32.xlu0 %v1774
        %v1776 = vpop.xlane.xlu0 %1775
        %v1777 = vmax.f32 %v1672, %v1674
        %1778 = vmax.xlane.f32.xlu0 %v1777
        %v1779 = vpop.xlane.xlu0 %1778
        %v1780 = vmax.f32 %v1678, %v1680
        %1781 = vmax.xlane.f32.xlu0 %v1780
        %v1782 = vpop.xlane.xlu0 %1781
        %v1783 = vmax.f32 %v1682, %v1684
        %1784 = vmax.xlane.f32.xlu0 %v1783
        %v1785 = vpop.xlane.xlu0 %1784
        %v1786 = vmax.f32 %v1688, %v1690
        %1787 = vmax.xlane.f32.xlu0 %v1786
        %v1788 = vpop.xlane.xlu0 %1787
        %v1789 = vmax.f32 %v1692, %v1694
        %1790 = vmax.xlane.f32.xlu0 %v1789
        %v1791 = vpop.xlane.xlu0 %1790
        %v1792 = vsub.f32 %v1538, %v1698
        %v1793 = vsub.f32 %v1540, %v1698
        %v1794 = vsub.f32 %v1542, %v1701
        %v1795 = vsub.f32 %v1544, %v1701
        %v1796 = vsub.f32 %v1548, %v1704
        %v1797 = vsub.f32 %v1550, %v1704
        %v1798 = vsub.f32 %v1552, %v1707
        %v1799 = vsub.f32 %v1554, %v1707
        %v1800 = vsub.f32 %v1558, %v1710
        %v1801 = vsub.f32 %v1560, %v1710
        %v1802 = vsub.f32 %v1562, %v1713
        %v1803 = vsub.f32 %v1564, %v1713
        %v1804 = vsub.f32 %v1568, %v1716
        %v1805 = vsub.f32 %v1570, %v1716
        %v1806 = vsub.f32 %v1572, %v1719
        %v1807 = vsub.f32 %v1574, %v1719
        %v1808 = vsub.f32 %v1578, %v1722
        %v1809 = vsub.f32 %v1580, %v1722
        %v1810 = vsub.f32 %v1582, %v1725
        %v1811 = vsub.f32 %v1584, %v1725
        %v1812 = vsub.f32 %v1588, %v1728
        %v1813 = vsub.f32 %v1590, %v1728
        %v1814 = vsub.f32 %v1592, %v1731
        %v1815 = vsub.f32 %v1594, %v1731
        %v1816 = vsub.f32 %v1598, %v1734
        %v1817 = vsub.f32 %v1600, %v1734
        %v1818 = vsub.f32 %v1602, %v1737
        %v1819 = vsub.f32 %v1604, %v1737
        %v1820 = vsub.f32 %v1608, %v1740
        %v1821 = vsub.f32 %v1610, %v1740
        %v1822 = vsub.f32 %v1612, %v1743
        %v1823 = vsub.f32 %v1614, %v1743
        %v1824 = vsub.f32 %v1618, %v1746
        %v1825 = vsub.f32 %v1620, %v1746
        %v1826 = vsub.f32 %v1622, %v1749
        %v1827 = vsub.f32 %v1624, %v1749
        %v1828 = vsub.f32 %v1628, %v1752
        %v1829 = vsub.f32 %v1630, %v1752
        %v1830 = vsub.f32 %v1632, %v1755
        %v1831 = vsub.f32 %v1634, %v1755
        %v1832 = vsub.f32 %v1638, %v1758
        %v1833 = vsub.f32 %v1640, %v1758
        %v1834 = vsub.f32 %v1642, %v1761
        %v1835 = vsub.f32 %v1644, %v1761
        %v1836 = vsub.f32 %v1648, %v1764
        %v1837 = vsub.f32 %v1650, %v1764
        %v1838 = vsub.f32 %v1652, %v1767
        %v1839 = vsub.f32 %v1654, %v1767
        %v1840 = vsub.f32 %v1658, %v1770
        %v1841 = vsub.f32 %v1660, %v1770
        %v1842 = vsub.f32 %v1662, %v1773
        %v1843 = vsub.f32 %v1664, %v1773
        %v1844 = vsub.f32 %v1668, %v1776
        %v1845 = vsub.f32 %v1670, %v1776
        %v1846 = vsub.f32 %v1672, %v1779
        %v1847 = vsub.f32 %v1674, %v1779
        %v1848 = vsub.f32 %v1678, %v1782
        %v1849 = vsub.f32 %v1680, %v1782
        %v1850 = vsub.f32 %v1682, %v1785
        %v1851 = vsub.f32 %v1684, %v1785
        %v1852 = vsub.f32 %v1688, %v1788
        %v1853 = vsub.f32 %v1690, %v1788
        %v1854 = vsub.f32 %v1692, %v1791
        %v1855 = vsub.f32 %v1694, %v1791
        %v1856 = vmul.f32 %v1792, 1.442695
        %v1857 = vpow.pop %v1856
        %v1858 = vmul.f32 %v1793, 1.442695
        %v1859 = vpow.pop %v1858
        %v1860 = vmul.f32 %v1794, 1.442695
        %v1861 = vpow.pop %v1860
        %v1862 = vmul.f32 %v1795, 1.442695
        %v1863 = vpow.pop %v1862
        %v1864 = vmul.f32 %v1796, 1.442695
        %v1865 = vpow.pop %v1864
        %v1866 = vmul.f32 %v1797, 1.442695
        %v1867 = vpow.pop %v1866
        %v1868 = vmul.f32 %v1798, 1.442695
        %v1869 = vpow.pop %v1868
        %v1870 = vmul.f32 %v1799, 1.442695
        %v1871 = vpow.pop %v1870
        %v1872 = vmul.f32 %v1800, 1.442695
        %v1873 = vpow.pop %v1872
        %v1874 = vmul.f32 %v1801, 1.442695
        %v1875 = vpow.pop %v1874
        %v1876 = vmul.f32 %v1802, 1.442695
        %v1877 = vpow.pop %v1876
        %v1878 = vmul.f32 %v1803, 1.442695
        %v1879 = vpow.pop %v1878
        %v1880 = vmul.f32 %v1804, 1.442695
        %v1881 = vpow.pop %v1880
        %v1882 = vmul.f32 %v1805, 1.442695
        %v1883 = vpow.pop %v1882
        %v1884 = vmul.f32 %v1806, 1.442695
        %v1885 = vpow.pop %v1884
        %v1886 = vmul.f32 %v1807, 1.442695
        %v1887 = vpow.pop %v1886
        %v1888 = vmul.f32 %v1808, 1.442695
        %v1889 = vpow.pop %v1888
        %v1890 = vmul.f32 %v1809, 1.442695
        %v1891 = vpow.pop %v1890
        %v1892 = vmul.f32 %v1810, 1.442695
        %v1893 = vpow.pop %v1892
        %v1894 = vmul.f32 %v1811, 1.442695
        %v1895 = vpow.pop %v1894
        %v1896 = vmul.f32 %v1812, 1.442695
        %v1897 = vpow.pop %v1896
        %v1898 = vmul.f32 %v1813, 1.442695
        %v1899 = vpow.pop %v1898
        %v1900 = vmul.f32 %v1814, 1.442695
        %v1901 = vpow.pop %v1900
        %v1902 = vmul.f32 %v1815, 1.442695
        %v1903 = vpow.pop %v1902
        %v1904 = vmul.f32 %v1816, 1.442695
        %v1905 = vpow.pop %v1904
        %v1906 = vmul.f32 %v1817, 1.442695
        %v1907 = vpow.pop %v1906
        %v1908 = vmul.f32 %v1818, 1.442695
        %v1909 = vpow.pop %v1908
        %v1910 = vmul.f32 %v1819, 1.442695
        %v1911 = vpow.pop %v1910
        %v1912 = vmul.f32 %v1820, 1.442695
        %v1913 = vpow.pop %v1912
        %v1914 = vmul.f32 %v1821, 1.442695
        %v1915 = vpow.pop %v1914
        %v1916 = vmul.f32 %v1822, 1.442695
        %v1917 = vpow.pop %v1916
        %v1918 = vmul.f32 %v1823, 1.442695
        %v1919 = vpow.pop %v1918
        %v1920 = vmul.f32 %v1824, 1.442695
        %v1921 = vpow.pop %v1920
        %v1922 = vmul.f32 %v1825, 1.442695
        %v1923 = vpow.pop %v1922
        %v1924 = vmul.f32 %v1826, 1.442695
        %v1925 = vpow.pop %v1924
        %v1926 = vmul.f32 %v1827, 1.442695
        %v1927 = vpow.pop %v1926
        %v1928 = vmul.f32 %v1828, 1.442695
        %v1929 = vpow.pop %v1928
        %v1930 = vmul.f32 %v1829, 1.442695
        %v1931 = vpow.pop %v1930
        %v1932 = vmul.f32 %v1830, 1.442695
        %v1933 = vpow.pop %v1932
        %v1934 = vmul.f32 %v1831, 1.442695
        %v1935 = vpow.pop %v1934
        %v1936 = vmul.f32 %v1832, 1.442695
        %v1937 = vpow.pop %v1936
        %v1938 = vmul.f32 %v1833, 1.442695
        %v1939 = vpow.pop %v1938
        %v1940 = vmul.f32 %v1834, 1.442695
        %v1941 = vpow.pop %v1940
        %v1942 = vmul.f32 %v1835, 1.442695
        %v1943 = vpow.pop %v1942
        %v1944 = vmul.f32 %v1836, 1.442695
        %v1945 = vpow.pop %v1944
        %v1946 = vmul.f32 %v1837, 1.442695
        %v1947 = vpow.pop %v1946
        %v1948 = vmul.f32 %v1838, 1.442695
        %v1949 = vpow.pop %v1948
        %v1950 = vmul.f32 %v1839, 1.442695
        %v1951 = vpow.pop %v1950
        %v1952 = vmul.f32 %v1840, 1.442695
        %v1953 = vpow.pop %v1952
        %v1954 = vmul.f32 %v1841, 1.442695
        %v1955 = vpow.pop %v1954
        %v1956 = vmul.f32 %v1842, 1.442695
        %v1957 = vpow.pop %v1956
        %v1958 = vmul.f32 %v1843, 1.442695
        %v1959 = vpow.pop %v1958
        %v1960 = vmul.f32 %v1844, 1.442695
        %v1961 = vpow.pop %v1960
        %v1962 = vmul.f32 %v1845, 1.442695
        %v1963 = vpow.pop %v1962
        %v1964 = vmul.f32 %v1846, 1.442695
        %v1965 = vpow.pop %v1964
        %v1966 = vmul.f32 %v1847, 1.442695
        %v1967 = vpow.pop %v1966
        %v1968 = vmul.f32 %v1848, 1.442695
        %v1969 = vpow.pop %v1968
        %v1970 = vmul.f32 %v1849, 1.442695
        %v1971 = vpow.pop %v1970
        %v1972 = vmul.f32 %v1850, 1.442695
        %v1973 = vpow.pop %v1972
        %v1974 = vmul.f32 %v1851, 1.442695
        %v1975 = vpow.pop %v1974
        %v1976 = vmul.f32 %v1852, 1.442695
        %v1977 = vpow.pop %v1976
        %v1978 = vmul.f32 %v1853, 1.442695
        %v1979 = vpow.pop %v1978
        %v1980 = vmul.f32 %v1854, 1.442695
        %v1981 = vpow.pop %v1980
        %v1982 = vmul.f32 %v1855, 1.442695
        %v1983 = vpow.pop %v1982
        %v1984 = vadd.f32 %v1857, %v1859
        %1985 = vadd.xlane.f32.xlu0 %v1984
        %v1986 = vpop.xlane.xlu0 %1985
        %v1987 = vadd.f32 %v1861, %v1863
        %1988 = vadd.xlane.f32.xlu0 %v1987
        %v1989 = vpop.xlane.xlu0 %1988
        %v1990 = vadd.f32 %v1865, %v1867
        %1991 = vadd.xlane.f32.xlu0 %v1990
        %v1992 = vpop.xlane.xlu0 %1991
        %v1993 = vadd.f32 %v1869, %v1871
        %1994 = vadd.xlane.f32.xlu0 %v1993
        %v1995 = vpop.xlane.xlu0 %1994
        %v1996 = vadd.f32 %v1873, %v1875
        %1997 = vadd.xlane.f32.xlu0 %v1996
        %v1998 = vpop.xlane.xlu0 %1997
        %v1999 = vadd.f32 %v1877, %v1879
        %2000 = vadd.xlane.f32.xlu0 %v1999
        %v2001 = vpop.xlane.xlu0 %2000
        %v2002 = vadd.f32 %v1881, %v1883
        %2003 = vadd.xlane.f32.xlu0 %v2002
        %v2004 = vpop.xlane.xlu0 %2003
        %v2005 = vadd.f32 %v1885, %v1887
        %2006 = vadd.xlane.f32.xlu0 %v2005
        %v2007 = vpop.xlane.xlu0 %2006
        %v2008 = vadd.f32 %v1889, %v1891
        %2009 = vadd.xlane.f32.xlu0 %v2008
        %v2010 = vpop.xlane.xlu0 %2009
        %v2011 = vadd.f32 %v1893, %v1895
        %2012 = vadd.xlane.f32.xlu0 %v2011
        %v2013 = vpop.xlane.xlu0 %2012
        %v2014 = vadd.f32 %v1897, %v1899
        %2015 = vadd.xlane.f32.xlu0 %v2014
        %v2016 = vpop.xlane.xlu0 %2015
        %v2017 = vadd.f32 %v1901, %v1903
        %2018 = vadd.xlane.f32.xlu0 %v2017
        %v2019 = vpop.xlane.xlu0 %2018
        %v2020 = vadd.f32 %v1905, %v1907
        %2021 = vadd.xlane.f32.xlu0 %v2020
        %v2022 = vpop.xlane.xlu0 %2021
        %v2023 = vadd.f32 %v1909, %v1911
        %2024 = vadd.xlane.f32.xlu0 %v2023
        %v2025 = vpop.xlane.xlu0 %2024
        %v2026 = vadd.f32 %v1913, %v1915
        %2027 = vadd.xlane.f32.xlu0 %v2026
        %v2028 = vpop.xlane.xlu0 %2027
        %v2029 = vadd.f32 %v1917, %v1919
        %2030 = vadd.xlane.f32.xlu0 %v2029
        %v2031 = vpop.xlane.xlu0 %2030
        %v2032 = vadd.f32 %v1921, %v1923
        %2033 = vadd.xlane.f32.xlu0 %v2032
        %v2034 = vpop.xlane.xlu0 %2033
        %v2035 = vadd.f32 %v1925, %v1927
        %2036 = vadd.xlane.f32.xlu0 %v2035
        %v2037 = vpop.xlane.xlu0 %2036
        %v2038 = vadd.f32 %v1929, %v1931
        %2039 = vadd.xlane.f32.xlu0 %v2038
        %v2040 = vpop.xlane.xlu0 %2039
        %v2041 = vadd.f32 %v1933, %v1935
        %2042 = vadd.xlane.f32.xlu0 %v2041
        %v2043 = vpop.xlane.xlu0 %2042
        %v2044 = vadd.f32 %v1937, %v1939
        %2045 = vadd.xlane.f32.xlu0 %v2044
        %v2046 = vpop.xlane.xlu0 %2045
        %v2047 = vadd.f32 %v1941, %v1943
        %2048 = vadd.xlane.f32.xlu0 %v2047
        %v2049 = vpop.xlane.xlu0 %2048
        %v2050 = vadd.f32 %v1945, %v1947
        %2051 = vadd.xlane.f32.xlu0 %v2050
        %v2052 = vpop.xlane.xlu0 %2051
        %v2053 = vadd.f32 %v1949, %v1951
        %2054 = vadd.xlane.f32.xlu0 %v2053
        %v2055 = vpop.xlane.xlu0 %2054
        %v2056 = vadd.f32 %v1953, %v1955
        %2057 = vadd.xlane.f32.xlu0 %v2056
        %v2058 = vpop.xlane.xlu0 %2057
        %v2059 = vadd.f32 %v1957, %v1959
        %2060 = vadd.xlane.f32.xlu0 %v2059
        %v2061 = vpop.xlane.xlu0 %2060
        %v2062 = vadd.f32 %v1961, %v1963
        %2063 = vadd.xlane.f32.xlu0 %v2062
        %v2064 = vpop.xlane.xlu0 %2063
        %v2065 = vadd.f32 %v1965, %v1967
        %2066 = vadd.xlane.f32.xlu0 %v2065
        %v2067 = vpop.xlane.xlu0 %2066
        %v2068 = vadd.f32 %v1969, %v1971
        %2069 = vadd.xlane.f32.xlu0 %v2068
        %v2070 = vpop.xlane.xlu0 %2069
        %v2071 = vadd.f32 %v1973, %v1975
        %2072 = vadd.xlane.f32.xlu0 %v2071
        %v2073 = vpop.xlane.xlu0 %2072
        %v2074 = vadd.f32 %v1977, %v1979
        %2075 = vadd.xlane.f32.xlu0 %v2074
        %v2076 = vpop.xlane.xlu0 %2075
        %v2077 = vadd.f32 %v1981, %v1983
        %2078 = vadd.xlane.f32.xlu0 %v2077
        %v2079 = vpop.xlane.xlu0 %2078
        %v2080 = vpack.c.bf16 %v1861, %v1857
        %v2081 = vpack.c.bf16 %v1863, %v1859
        %v2082 = vpack.c.bf16 %v1869, %v1865
        %v2083 = vpack.c.bf16 %v1871, %v1867
        %v2084 = vpack.c.bf16 %v1877, %v1873
        %v2085 = vpack.c.bf16 %v1879, %v1875
        %v2086 = vpack.c.bf16 %v1885, %v1881
        %v2087 = vpack.c.bf16 %v1887, %v1883
        %v2088 = vpack.c.bf16 %v1893, %v1889
        %v2089 = vpack.c.bf16 %v1895, %v1891
        %v2090 = vpack.c.bf16 %v1901, %v1897
        %v2091 = vpack.c.bf16 %v1903, %v1899
        %v2092 = vpack.c.bf16 %v1909, %v1905
        %v2093 = vpack.c.bf16 %v1911, %v1907
        %v2094 = vpack.c.bf16 %v1917, %v1913
        %v2095 = vpack.c.bf16 %v1919, %v1915
        %v2096 = vpack.c.bf16 %v1925, %v1921
        %v2097 = vpack.c.bf16 %v1927, %v1923
        %v2098 = vpack.c.bf16 %v1933, %v1929
        %v2099 = vpack.c.bf16 %v1935, %v1931
        %v2100 = vpack.c.bf16 %v1941, %v1937
        %v2101 = vpack.c.bf16 %v1943, %v1939
        %v2102 = vpack.c.bf16 %v1949, %v1945
        %v2103 = vpack.c.bf16 %v1951, %v1947
        %v2104 = vpack.c.bf16 %v1957, %v1953
        %v2105 = vpack.c.bf16 %v1959, %v1955
        %v2106 = vpack.c.bf16 %v1965, %v1961
        %v2107 = vpack.c.bf16 %v1967, %v1963
        %v2108 = vpack.c.bf16 %v1973, %v1969
        %v2109 = vpack.c.bf16 %v1975, %v1971
        %v2110 = vpack.c.bf16 %v1981, %v1977
        %v2111 = vpack.c.bf16 %v1983, %v1979
        %v2112 = vpack.c.bf16 %v1316, %v1313
        %v2113 = vpack.c.bf16 %v1324, %v1321
        %v2114 = vpack.c.bf16 %v1332, %v1329
        %v2115 = vpack.c.bf16 %v1340, %v1337
        %v2116 = vpack.c.bf16 %v1348, %v1345
        %v2117 = vpack.c.bf16 %v1356, %v1353
        %v2118 = vpack.c.bf16 %v1364, %v1361
        %v2119 = vpack.c.bf16 %v1372, %v1369
        %v2120 = vpack.c.bf16 %v1380, %v1377
        %v2121 = vpack.c.bf16 %v1388, %v1385
        %v2122 = vpack.c.bf16 %v1396, %v1393
        %v2123 = vpack.c.bf16 %v1404, %v1401
        %v2124 = vpack.c.bf16 %v1412, %v1409
        %v2125 = vpack.c.bf16 %v1420, %v1417
        %v2126 = vpack.c.bf16 %v1428, %v1425
        %v2127 = vpack.c.bf16 %v1436, %v1433
        %2128 = vmatprep.subr.bf16.mxu0 0
        %2129 = vmatpush1.bf16.msra.mxu0 %v2119
        %2130 = vmatprep.subr.bf16.mxu0 0
        %2131 = vmatpush1.bf16.msra.mxu0 %v2118
        %2132 = vmatprep.subr.bf16.mxu0 0
        %2133 = vmatpush1.bf16.msra.mxu0 %v2117
        %2134 = vmatprep.subr.bf16.mxu0 0
        %2135 = vmatpush1.bf16.msra.mxu0 %v2116
        %2136 = vmatprep.subr.bf16.mxu0 0
        %2137 = vmatpush1.bf16.msra.mxu0 %v2115
        %2138 = vmatprep.subr.bf16.mxu0 0
        %2139 = vmatpush1.bf16.msra.mxu0 %v2114
        %2140 = vmatprep.subr.bf16.mxu0 0
        %2141 = vmatpush1.bf16.msra.mxu0 %v2113
        %2142 = vmatprep.subr.bf16.mxu0 0
        %2143 = vmatpush1.bf16.msra.mxu0 %v2112
        %2144 = vmatprep.subr.bf16.mxu0 0
        %2145 = vmatpush2.bf16.msra.mxu0 %v2127
        %2146 = vmatprep.subr.bf16.mxu0 0
        %2147 = vmatpush2.bf16.msra.mxu0 %v2126
        %2148 = vmatprep.subr.bf16.mxu0 0
        %2149 = vmatpush2.bf16.msra.mxu0 %v2125
        %2150 = vmatprep.subr.bf16.mxu0 0
        %2151 = vmatpush2.bf16.msra.mxu0 %v2124
        %2152 = vmatprep.subr.bf16.mxu0 0
        %2153 = vmatpush2.bf16.msra.mxu0 %v2123
        %2154 = vmatprep.subr.bf16.mxu0 0
        %2155 = vmatpush2.bf16.msra.mxu0 %v2122
        %2156 = vmatprep.subr.bf16.mxu0 0
        %2157 = vmatpush2.bf16.msra.mxu0 %v2121
        %2158 = vmatprep.subr.bf16.mxu0 0
        %2159 = vmatpush2.bf16.msra.mxu0 %v2120
        %2160 = vmatprep.mubr.bf16.mxu0 %v2081
        %2161 = vmatmul.mubr.bf16.gmra.mxu0 %v2080
        %v2162 = vpop.f32.mrf.mxu0
        %v2163 = vadd.f32 0.0, %v2162
        %v2164 = vpop.f32.mrf.mxu0
        %v2165 = vpop.f32.mrf.mxu0
        %v2166 = vadd.f32 0.0, %v2165
        %v2167 = vpop.f32.mrf.mxu0
        %2168 = vmatprep.mubr.bf16.mxu0 %v2083
        %2169 = vmatmul.mubr.bf16.gmra.mxu0 %v2082
        %v2170 = vpop.f32.mrf.mxu0
        %v2171 = vadd.f32 0.0, %v2170
        %v2172 = vpop.f32.mrf.mxu0
        %v2173 = vpop.f32.mrf.mxu0
        %v2174 = vadd.f32 0.0, %v2173
        %v2175 = vpop.f32.mrf.mxu0
        %2176 = vmatprep.mubr.bf16.mxu0 %v2085
        %2177 = vmatmul.mubr.bf16.gmra.mxu0 %v2084
        %v2178 = vpop.f32.mrf.mxu0
        %v2179 = vadd.f32 0.0, %v2178
        %v2180 = vpop.f32.mrf.mxu0
        %v2181 = vpop.f32.mrf.mxu0
        %v2182 = vadd.f32 0.0, %v2181
        %v2183 = vpop.f32.mrf.mxu0
        %2184 = vmatprep.mubr.bf16.mxu0 %v2087
        %2185 = vmatmul.mubr.bf16.gmra.mxu0 %v2086
        %v2186 = vpop.f32.mrf.mxu0
        %v2187 = vadd.f32 0.0, %v2186
        %v2188 = vpop.f32.mrf.mxu0
        %v2189 = vpop.f32.mrf.mxu0
        %v2190 = vadd.f32 0.0, %v2189
        %v2191 = vpop.f32.mrf.mxu0
        %2192 = vmatprep.mubr.bf16.mxu0 %v2089
        %2193 = vmatmul.mubr.bf16.gmra.mxu0 %v2088
        %v2194 = vpop.f32.mrf.mxu0
        %v2195 = vadd.f32 0.0, %v2194
        %v2196 = vpop.f32.mrf.mxu0
        %v2197 = vpop.f32.mrf.mxu0
        %v2198 = vadd.f32 0.0, %v2197
        %v2199 = vpop.f32.mrf.mxu0
        %2200 = vmatprep.mubr.bf16.mxu0 %v2091
        %2201 = vmatmul.mubr.bf16.gmra.mxu0 %v2090
        %v2202 = vpop.f32.mrf.mxu0
        %v2203 = vadd.f32 0.0, %v2202
        %v2204 = vpop.f32.mrf.mxu0
        %v2205 = vpop.f32.mrf.mxu0
        %v2206 = vadd.f32 0.0, %v2205
        %v2207 = vpop.f32.mrf.mxu0
        %2208 = vmatprep.mubr.bf16.mxu0 %v2093
        %2209 = vmatmul.mubr.bf16.gmra.mxu0 %v2092
        %v2210 = vpop.f32.mrf.mxu0
        %v2211 = vadd.f32 0.0, %v2210
        %v2212 = vpop.f32.mrf.mxu0
        %v2213 = vpop.f32.mrf.mxu0
        %v2214 = vadd.f32 0.0, %v2213
        %v2215 = vpop.f32.mrf.mxu0
        %2216 = vmatprep.mubr.bf16.mxu0 %v2095
        %2217 = vmatmul.mubr.bf16.gmra.mxu0 %v2094
        %v2218 = vpop.f32.mrf.mxu0
        %v2219 = vadd.f32 0.0, %v2218
        %v2220 = vpop.f32.mrf.mxu0
        %v2221 = vpop.f32.mrf.mxu0
        %v2222 = vadd.f32 0.0, %v2221
        %v2223 = vpop.f32.mrf.mxu0
        %2224 = vmatprep.mubr.bf16.mxu0 %v2097
        %2225 = vmatmul.mubr.bf16.gmra.mxu0 %v2096
        %v2226 = vpop.f32.mrf.mxu0
        %v2227 = vadd.f32 0.0, %v2226
        %v2228 = vpop.f32.mrf.mxu0
        %v2229 = vpop.f32.mrf.mxu0
        %v2230 = vadd.f32 0.0, %v2229
        %v2231 = vpop.f32.mrf.mxu0
        %2232 = vmatprep.mubr.bf16.mxu0 %v2099
        %2233 = vmatmul.mubr.bf16.gmra.mxu0 %v2098
        %v2234 = vpop.f32.mrf.mxu0
        %v2235 = vadd.f32 0.0, %v2234
        %v2236 = vpop.f32.mrf.mxu0
        %v2237 = vpop.f32.mrf.mxu0
        %v2238 = vadd.f32 0.0, %v2237
        %v2239 = vpop.f32.mrf.mxu0
        %2240 = vmatprep.mubr.bf16.mxu0 %v2101
        %2241 = vmatmul.mubr.bf16.gmra.mxu0 %v2100
        %v2242 = vpop.f32.mrf.mxu0
        %v2243 = vadd.f32 0.0, %v2242
        %v2244 = vpop.f32.mrf.mxu0
        %v2245 = vpop.f32.mrf.mxu0
        %v2246 = vadd.f32 0.0, %v2245
        %v2247 = vpop.f32.mrf.mxu0
        %2248 = vmatprep.mubr.bf16.mxu0 %v2103
        %2249 = vmatmul.mubr.bf16.gmra.mxu0 %v2102
        %v2250 = vpop.f32.mrf.mxu0
        %v2251 = vadd.f32 0.0, %v2250
        %v2252 = vpop.f32.mrf.mxu0
        %v2253 = vpop.f32.mrf.mxu0
        %v2254 = vadd.f32 0.0, %v2253
        %v2255 = vpop.f32.mrf.mxu0
        %2256 = vmatprep.mubr.bf16.mxu0 %v2105
        %2257 = vmatmul.mubr.bf16.gmra.mxu0 %v2104
        %v2258 = vpop.f32.mrf.mxu0
        %v2259 = vadd.f32 0.0, %v2258
        %v2260 = vpop.f32.mrf.mxu0
        %v2261 = vpop.f32.mrf.mxu0
        %v2262 = vadd.f32 0.0, %v2261
        %v2263 = vpop.f32.mrf.mxu0
        %2264 = vmatprep.mubr.bf16.mxu0 %v2107
        %2265 = vmatmul.mubr.bf16.gmra.mxu0 %v2106
        %v2266 = vpop.f32.mrf.mxu0
        %v2267 = vadd.f32 0.0, %v2266
        %v2268 = vpop.f32.mrf.mxu0
        %v2269 = vpop.f32.mrf.mxu0
        %v2270 = vadd.f32 0.0, %v2269
        %v2271 = vpop.f32.mrf.mxu0
        %2272 = vmatprep.mubr.bf16.mxu0 %v2109
        %2273 = vmatmul.mubr.bf16.gmra.mxu0 %v2108
        %v2274 = vpop.f32.mrf.mxu0
        %v2275 = vadd.f32 0.0, %v2274
        %v2276 = vpop.f32.mrf.mxu0
        %v2277 = vpop.f32.mrf.mxu0
        %v2278 = vadd.f32 0.0, %v2277
        %v2279 = vpop.f32.mrf.mxu0
        %2280 = vmatprep.mubr.bf16.mxu0 %v2111
        %2281 = vmatmul.mubr.bf16.gmra.mxu0 %v2110
        %v2282 = vpop.f32.mrf.mxu0
        %v2283 = vadd.f32 0.0, %v2282
        %v2284 = vpop.f32.mrf.mxu0
        %v2285 = vpop.f32.mrf.mxu0
        %v2286 = vadd.f32 0.0, %v2285
        %v2287 = vpop.f32.mrf.mxu0
        %2288 = vdwg.mxu0
        %v2289 = vrcp.pop %v1986
        %v2290 = vrcp.pop %v1989
        %v2291 = vrcp.pop %v1992
        %v2292 = vrcp.pop %v1995
        %v2293 = vrcp.pop %v1998
        %v2294 = vrcp.pop %v2001
        %v2295 = vrcp.pop %v2004
        %v2296 = vrcp.pop %v2007
        %v2297 = vrcp.pop %v2010
        %v2298 = vrcp.pop %v2013
        %v2299 = vrcp.pop %v2016
        %v2300 = vrcp.pop %v2019
        %v2301 = vrcp.pop %v2022
        %v2302 = vrcp.pop %v2025
        %v2303 = vrcp.pop %v2028
        %v2304 = vrcp.pop %v2031
        %v2305 = vrcp.pop %v2034
        %v2306 = vrcp.pop %v2037
        %v2307 = vrcp.pop %v2040
        %v2308 = vrcp.pop %v2043
        %v2309 = vrcp.pop %v2046
        %v2310 = vrcp.pop %v2049
        %v2311 = vrcp.pop %v2052
        %v2312 = vrcp.pop %v2055
        %v2313 = vrcp.pop %v2058
        %v2314 = vrcp.pop %v2061
        %v2315 = vrcp.pop %v2064
        %v2316 = vrcp.pop %v2067
        %v2317 = vrcp.pop %v2070
        %v2318 = vrcp.pop %v2073
        %v2319 = vrcp.pop %v2076
        %v2320 = vrcp.pop %v2079
        %v2321 = vmul.f32 %v2163, %v2289
        %v2322 = vmul.f32 %v2166, %v2290
        %v2323 = vmul.f32 %v2171, %v2291
        %v2324 = vmul.f32 %v2174, %v2292
        %v2325 = vmul.f32 %v2179, %v2293
        %v2326 = vmul.f32 %v2182, %v2294
        %v2327 = vmul.f32 %v2187, %v2295
        %v2328 = vmul.f32 %v2190, %v2296
        %v2329 = vmul.f32 %v2195, %v2297
        %v2330 = vmul.f32 %v2198, %v2298
        %v2331 = vmul.f32 %v2203, %v2299
        %v2332 = vmul.f32 %v2206, %v2300
        %v2333 = vmul.f32 %v2211, %v2301
        %v2334 = vmul.f32 %v2214, %v2302
        %v2335 = vmul.f32 %v2219, %v2303
        %v2336 = vmul.f32 %v2222, %v2304
        %v2337 = vmul.f32 %v2227, %v2305
        %v2338 = vmul.f32 %v2230, %v2306
        %v2339 = vmul.f32 %v2235, %v2307
        %v2340 = vmul.f32 %v2238, %v2308
        %v2341 = vmul.f32 %v2243, %v2309
        %v2342 = vmul.f32 %v2246, %v2310
        %v2343 = vmul.f32 %v2251, %v2311
        %v2344 = vmul.f32 %v2254, %v2312
        %v2345 = vmul.f32 %v2259, %v2313
        %v2346 = vmul.f32 %v2262, %v2314
        %v2347 = vmul.f32 %v2267, %v2315
        %v2348 = vmul.f32 %v2270, %v2316
        %v2349 = vmul.f32 %v2275, %v2317
        %v2350 = vmul.f32 %v2278, %v2318
        %v2351 = vmul.f32 %v2283, %v2319
        %v2352 = vmul.f32 %v2286, %v2320
        %v2353 = vpack.c.bf16 %v2322, %v2321
        %v2354 = vpack.c.bf16 %v2324, %v2323
        %v2355 = vpack.c.bf16 %v2326, %v2325
        %v2356 = vpack.c.bf16 %v2328, %v2327
        %v2357 = vpack.c.bf16 %v2330, %v2329
        %v2358 = vpack.c.bf16 %v2332, %v2331
        %v2359 = vpack.c.bf16 %v2334, %v2333
        %v2360 = vpack.c.bf16 %v2336, %v2335
        %v2361 = vpack.c.bf16 %v2338, %v2337
        %v2362 = vpack.c.bf16 %v2340, %v2339
        %v2363 = vpack.c.bf16 %v2342, %v2341
        %v2364 = vpack.c.bf16 %v2344, %v2343
        %v2365 = vpack.c.bf16 %v2346, %v2345
        %v2366 = vpack.c.bf16 %v2348, %v2347
        %v2367 = vpack.c.bf16 %v2350, %v2349
        %v2368 = vpack.c.bf16 %v2352, %v2351
        %v2369 = vld [vmem:[%s426] sm:$0xf]
        %v2370 = vld [vmem:[%s426 + $0x4] sm:$0xf]
        %v2371 = vld [vmem:[%s426 + $0x8] sm:$0xf]
        %v2372 = vld [vmem:[%s426 + $0xc] sm:$0xf]
        %v2373 = vld [vmem:[%s426 + $0x10] sm:$0xf]
        %v2374 = vld [vmem:[%s426 + $0x14] sm:$0xf]
        %v2375 = vld [vmem:[%s426 + $0x18] sm:$0xf]
        %v2376 = vld [vmem:[%s426 + $0x1c] sm:$0xf]
        %v2377 = vld [vmem:[%s426 + $0x20] sm:$0xf]
        %v2378 = vld [vmem:[%s426 + $0x24] sm:$0xf]
        %v2379 = vld [vmem:[%s426 + $0x28] sm:$0xf]
        %v2380 = vld [vmem:[%s426 + $0x2c] sm:$0xf]
        %v2381 = vld [vmem:[%s426 + $0x30] sm:$0xf]
        %v2382 = vld [vmem:[%s426 + $0x34] sm:$0xf]
        %v2383 = vld [vmem:[%s426 + $0x38] sm:$0xf]
        %v2384 = vld [vmem:[%s426 + $0x3c] sm:$0xf]
        %v2385 = vld [vmem:[%s482] sm:$0x1]
        %v2387 = vlaneseq
        %v2388 = vshrl.u32 %v2387, 7
        %v2389 = vsub.s32 0, %v2388
        %v2390 = vrot.slane %v2385, %v2389
        %v2408 = vunpack.c.l.b16 %v2369
        %v2409 = vunpack.c.l.b16 %v2370
        %v2410 = vunpack.c.l.b16 %v2371
        %v2411 = vunpack.c.l.b16 %v2372
        %v2412 = vunpack.c.l.b16 %v2373
        %v2413 = vunpack.c.l.b16 %v2374
        %v2414 = vunpack.c.l.b16 %v2375
        %v2415 = vunpack.c.l.b16 %v2376
        %v2416 = vunpack.c.l.b16 %v2377
        %v2417 = vunpack.c.l.b16 %v2378
        %v2418 = vunpack.c.l.b16 %v2379
        %v2419 = vunpack.c.l.b16 %v2380
        %v2420 = vunpack.c.l.b16 %v2381
        %v2421 = vunpack.c.l.b16 %v2382
        %v2422 = vunpack.c.l.b16 %v2383
        %v2423 = vunpack.c.l.b16 %v2384
        %v2424 = vpack.c.b16 %v2409, %v2408
        %v2425 = vpack.c.b16 %v2411, %v2410
        %v2426 = vpack.c.b16 %v2413, %v2412
        %v2427 = vpack.c.b16 %v2415, %v2414
        %v2428 = vpack.c.b16 %v2417, %v2416
        %v2429 = vpack.c.b16 %v2419, %v2418
        %v2430 = vpack.c.b16 %v2421, %v2420
        %v2431 = vpack.c.b16 %v2423, %v2422
        %2440 = vmatprep.subr.bf16.mxu0 0
        %2441 = vmatpush1.bf16.msra.mxu0 %v2431
        %2442 = vmatprep.subr.bf16.mxu0 0
        %2443 = vmatpush1.bf16.msra.mxu0 %v2430
        %2444 = vmatprep.subr.bf16.mxu0 0
        %2445 = vmatpush1.bf16.msra.mxu0 %v2429
        %2446 = vmatprep.subr.bf16.mxu0 0
        %2447 = vmatpush1.bf16.msra.mxu0 %v2428
        %2448 = vmatprep.subr.bf16.mxu0 0
        %2449 = vmatpush1.bf16.msra.mxu0 %v2427
        %2450 = vmatprep.subr.bf16.mxu0 0
        %2451 = vmatpush1.bf16.msra.mxu0 %v2426
        %2452 = vmatprep.subr.bf16.mxu0 0
        %2453 = vmatpush1.bf16.msra.mxu0 %v2425
        %2454 = vmatprep.subr.bf16.mxu0 0
        %2455 = vmatpush1.bf16.msra.mxu0 %v2424
        %2456 = vmatprep.subr.bf16.mxu0 0
        %2457 = vmatpush2.bf16.msra.mxu0 0
        %2458 = vmatprep.subr.bf16.mxu0 0
        %2459 = vmatpush2.bf16.msra.mxu0 0
        %2460 = vmatprep.subr.bf16.mxu0 0
        %2461 = vmatpush2.bf16.msra.mxu0 0
        %2462 = vmatprep.subr.bf16.mxu0 0
        %2463 = vmatpush2.bf16.msra.mxu0 0
        %2464 = vmatprep.subr.bf16.mxu0 0
        %2465 = vmatpush2.bf16.msra.mxu0 0
        %2466 = vmatprep.subr.bf16.mxu0 0
        %2467 = vmatpush2.bf16.msra.mxu0 0
        %2468 = vmatprep.subr.bf16.mxu0 0
        %2469 = vmatpush2.bf16.msra.mxu0 0
        %2470 = vmatprep.subr.bf16.mxu0 0
        %2471 = vmatpush2.bf16.msra.mxu0 0
        %2472 = vmatprep.mubr.bf16.mxu0 0
        %2473 = vmatmul.mubr.bf16.gmra.mxu0 %v2353
        %v2474 = vpop.f32.mrf.mxu0
        %v2475 = vadd.f32 %v2390, %v2474
        %v2476 = vpop.f32.mrf.mxu0
        %v2477 = vpop.f32.mrf.mxu0
        %v2478 = vadd.f32 %v2390, %v2477
        %v2479 = vpop.f32.mrf.mxu0
        %2480 = vmatprep.mubr.bf16.mxu0 0
        %2481 = vmatmul.mubr.bf16.gmra.mxu0 %v2354
        %v2482 = vpop.f32.mrf.mxu0
        %v2483 = vadd.f32 %v2390, %v2482
        %v2484 = vpop.f32.mrf.mxu0
        %v2485 = vpop.f32.mrf.mxu0
        %v2486 = vadd.f32 %v2390, %v2485
        %v2487 = vpop.f32.mrf.mxu0
        %2488 = vmatprep.mubr.bf16.mxu0 0
        %2489 = vmatmul.mubr.bf16.gmra.mxu0 %v2355
        %v2490 = vpop.f32.mrf.mxu0
        %v2491 = vadd.f32 %v2390, %v2490
        %v2492 = vpop.f32.mrf.mxu0
        %v2493 = vpop.f32.mrf.mxu0
        %v2494 = vadd.f32 %v2390, %v2493
        %v2495 = vpop.f32.mrf.mxu0
        %2496 = vmatprep.mubr.bf16.mxu0 0
        %2497 = vmatmul.mubr.bf16.gmra.mxu0 %v2356
        %v2498 = vpop.f32.mrf.mxu0
        %v2499 = vadd.f32 %v2390, %v2498
        %v2500 = vpop.f32.mrf.mxu0
        %v2501 = vpop.f32.mrf.mxu0
        %v2502 = vadd.f32 %v2390, %v2501
        %v2503 = vpop.f32.mrf.mxu0
        %2504 = vmatprep.mubr.bf16.mxu0 0
        %2505 = vmatmul.mubr.bf16.gmra.mxu0 %v2357
        %v2506 = vpop.f32.mrf.mxu0
        %v2507 = vadd.f32 %v2390, %v2506
        %v2508 = vpop.f32.mrf.mxu0
        %v2509 = vpop.f32.mrf.mxu0
        %v2510 = vadd.f32 %v2390, %v2509
        %v2511 = vpop.f32.mrf.mxu0
        %2512 = vmatprep.mubr.bf16.mxu0 0
        %2513 = vmatmul.mubr.bf16.gmra.mxu0 %v2358
        %v2514 = vpop.f32.mrf.mxu0
        %v2515 = vadd.f32 %v2390, %v2514
        %v2516 = vpop.f32.mrf.mxu0
        %v2517 = vpop.f32.mrf.mxu0
        %v2518 = vadd.f32 %v2390, %v2517
        %v2519 = vpop.f32.mrf.mxu0
        %2520 = vmatprep.mubr.bf16.mxu0 0
        %2521 = vmatmul.mubr.bf16.gmra.mxu0 %v2359
        %v2522 = vpop.f32.mrf.mxu0
        %v2523 = vadd.f32 %v2390, %v2522
        %v2524 = vpop.f32.mrf.mxu0
        %v2525 = vpop.f32.mrf.mxu0
        %v2526 = vadd.f32 %v2390, %v2525
        %v2527 = vpop.f32.mrf.mxu0
        %2528 = vmatprep.mubr.bf16.mxu0 0
        %2529 = vmatmul.mubr.bf16.gmra.mxu0 %v2360
        %v2530 = vpop.f32.mrf.mxu0
        %v2531 = vadd.f32 %v2390, %v2530
        %v2532 = vpop.f32.mrf.mxu0
        %v2533 = vpop.f32.mrf.mxu0
        %v2534 = vadd.f32 %v2390, %v2533
        %v2535 = vpop.f32.mrf.mxu0
        %2536 = vmatprep.mubr.bf16.mxu0 0
        %2537 = vmatmul.mubr.bf16.gmra.mxu0 %v2361
        %v2538 = vpop.f32.mrf.mxu0
        %v2539 = vadd.f32 %v2390, %v2538
        %v2540 = vpop.f32.mrf.mxu0
        %v2541 = vpop.f32.mrf.mxu0
        %v2542 = vadd.f32 %v2390, %v2541
        %v2543 = vpop.f32.mrf.mxu0
        %2544 = vmatprep.mubr.bf16.mxu0 0
        %2545 = vmatmul.mubr.bf16.gmra.mxu0 %v2362
        %v2546 = vpop.f32.mrf.mxu0
        %v2547 = vadd.f32 %v2390, %v2546
        %v2548 = vpop.f32.mrf.mxu0
        %v2549 = vpop.f32.mrf.mxu0
        %v2550 = vadd.f32 %v2390, %v2549
        %v2551 = vpop.f32.mrf.mxu0
        %2552 = vmatprep.mubr.bf16.mxu0 0
        %2553 = vmatmul.mubr.bf16.gmra.mxu0 %v2363
        %v2554 = vpop.f32.mrf.mxu0
        %v2555 = vadd.f32 %v2390, %v2554
        %v2556 = vpop.f32.mrf.mxu0
        %v2557 = vpop.f32.mrf.mxu0
        %v2558 = vadd.f32 %v2390, %v2557
        %v2559 = vpop.f32.mrf.mxu0
        %2560 = vmatprep.mubr.bf16.mxu0 0
        %2561 = vmatmul.mubr.bf16.gmra.mxu0 %v2364
        %v2562 = vpop.f32.mrf.mxu0
        %v2563 = vadd.f32 %v2390, %v2562
        %v2564 = vpop.f32.mrf.mxu0
        %v2565 = vpop.f32.mrf.mxu0
        %v2566 = vadd.f32 %v2390, %v2565
        %v2567 = vpop.f32.mrf.mxu0
        %2568 = vmatprep.mubr.bf16.mxu0 0
        %2569 = vmatmul.mubr.bf16.gmra.mxu0 %v2365
        %v2570 = vpop.f32.mrf.mxu0
        %v2571 = vadd.f32 %v2390, %v2570
        %v2572 = vpop.f32.mrf.mxu0
        %v2573 = vpop.f32.mrf.mxu0
        %v2574 = vadd.f32 %v2390, %v2573
        %v2575 = vpop.f32.mrf.mxu0
        %2576 = vmatprep.mubr.bf16.mxu0 0
        %2577 = vmatmul.mubr.bf16.gmra.mxu0 %v2366
        %v2578 = vpop.f32.mrf.mxu0
        %v2579 = vadd.f32 %v2390, %v2578
        %v2580 = vpop.f32.mrf.mxu0
        %v2581 = vpop.f32.mrf.mxu0
        %v2582 = vadd.f32 %v2390, %v2581
        %v2583 = vpop.f32.mrf.mxu0
        %2584 = vmatprep.mubr.bf16.mxu0 0
        %2585 = vmatmul.mubr.bf16.gmra.mxu0 %v2367
        %v2586 = vpop.f32.mrf.mxu0
        %v2587 = vadd.f32 %v2390, %v2586
        %v2588 = vpop.f32.mrf.mxu0
        %v2589 = vpop.f32.mrf.mxu0
        %v2590 = vadd.f32 %v2390, %v2589
        %v2591 = vpop.f32.mrf.mxu0
        %2592 = vmatprep.mubr.bf16.mxu0 0
        %2593 = vmatmul.mubr.bf16.gmra.mxu0 %v2368
        %v2594 = vpop.f32.mrf.mxu0
        %v2595 = vadd.f32 %v2390, %v2594
        %v2596 = vpop.f32.mrf.mxu0
        %v2597 = vpop.f32.mrf.mxu0
        %v2598 = vadd.f32 %v2390, %v2597
        %v2599 = vpop.f32.mrf.mxu0
        %2600 = vdwg.mxu0
        %v2601 = vadd.f32 %v2475, %v484
        %v2602 = vadd.f32 %v2478, %v485
        %v2603 = vadd.f32 %v2483, %v486
        %v2604 = vadd.f32 %v2486, %v487
        %v2605 = vadd.f32 %v2491, %v488
        %v2606 = vadd.f32 %v2494, %v489
        %v2607 = vadd.f32 %v2499, %v490
        %v2608 = vadd.f32 %v2502, %v491
        %v2609 = vadd.f32 %v2507, %v492
        %v2610 = vadd.f32 %v2510, %v493
        %v2611 = vadd.f32 %v2515, %v494
        %v2612 = vadd.f32 %v2518, %v495
        %v2613 = vadd.f32 %v2523, %v496
        %v2614 = vadd.f32 %v2526, %v497
        %v2615 = vadd.f32 %v2531, %v498
        %v2616 = vadd.f32 %v2534, %v499
        %v2617 = vadd.f32 %v2539, %v500
        %v2618 = vadd.f32 %v2542, %v501
        %v2619 = vadd.f32 %v2547, %v502
        %v2620 = vadd.f32 %v2550, %v503
        %v2621 = vadd.f32 %v2555, %v504
        %v2622 = vadd.f32 %v2558, %v505
        %v2623 = vadd.f32 %v2563, %v506
        %v2624 = vadd.f32 %v2566, %v507
        %v2625 = vadd.f32 %v2571, %v508
        %v2626 = vadd.f32 %v2574, %v509
        %v2627 = vadd.f32 %v2579, %v510
        %v2628 = vadd.f32 %v2582, %v511
        %v2629 = vadd.f32 %v2587, %v512
        %v2630 = vadd.f32 %v2590, %v513
        %v2631 = vadd.f32 %v2595, %v514
        %v2632 = vadd.f32 %v2598, %v515
        %2633 = vst [vmem:[%s479] sm:$0xff] %v2601
        %2634 = vst [vmem:[%s479 + $0x8] sm:$0xff] %v2602
        %2635 = vst [vmem:[%s479 + $0x10] sm:$0xff] %v2603
        %2636 = vst [vmem:[%s479 + $0x18] sm:$0xff] %v2604
        %2637 = vst [vmem:[%s479 + $0x20] sm:$0xff] %v2605
        %2638 = vst [vmem:[%s479 + $0x28] sm:$0xff] %v2606
        %2639 = vst [vmem:[%s479 + $0x30] sm:$0xff] %v2607
        %2640 = vst [vmem:[%s479 + $0x38] sm:$0xff] %v2608
        %2641 = vst [vmem:[%s479 + $0x40] sm:$0xff] %v2609
        %2642 = vst [vmem:[%s479 + $0x48] sm:$0xff] %v2610
        %2643 = vst [vmem:[%s479 + $0x50] sm:$0xff] %v2611
        %2644 = vst [vmem:[%s479 + $0x58] sm:$0xff] %v2612
        %2645 = vst [vmem:[%s479 + $0x60] sm:$0xff] %v2613
        %2646 = vst [vmem:[%s479 + $0x68] sm:$0xff] %v2614
        %2647 = vst [vmem:[%s479 + $0x70] sm:$0xff] %v2615
        %2648 = vst [vmem:[%s479 + $0x78] sm:$0xff] %v2616
        %2649 = vst [vmem:[%s479 + $0x80] sm:$0xff] %v2617
        %2650 = vst [vmem:[%s479 + $0x88] sm:$0xff] %v2618
        %2651 = vst [vmem:[%s479 + $0x90] sm:$0xff] %v2619
        %2652 = vst [vmem:[%s479 + $0x98] sm:$0xff] %v2620
        %2653 = vst [vmem:[%s479 + $0xa0] sm:$0xff] %v2621
        %2654 = vst [vmem:[%s479 + $0xa8] sm:$0xff] %v2622
        %2655 = vst [vmem:[%s479 + $0xb0] sm:$0xff] %v2623
        %2656 = vst [vmem:[%s479 + $0xb8] sm:$0xff] %v2624
        %2657 = vst [vmem:[%s479 + $0xc0] sm:$0xff] %v2625
        %2658 = vst [vmem:[%s479 + $0xc8] sm:$0xff] %v2626
        %2659 = vst [vmem:[%s479 + $0xd0] sm:$0xff] %v2627
        %2660 = vst [vmem:[%s479 + $0xd8] sm:$0xff] %v2628
        %2661 = vst [vmem:[%s479 + $0xe0] sm:$0xff] %v2629
        %2662 = vst [vmem:[%s479 + $0xe8] sm:$0xff] %v2630
        %2663 = vst [vmem:[%s479 + $0xf0] sm:$0xff] %v2631
        %2664 = vst [vmem:[%s479 + $0xf8] sm:$0xff] %v2632
        %s2665 = sand.u32 %s224, 1
        %s2666 = scalar_lea.sflag [#allocation4], %s2665
        %s2667 = sand.u32 %s224, 1
        %s2668 = smul.addr %s2667, 256
        %s2669 = scalar_lea.vmem [#allocation11], %s2668
        // Predicated region
        $region73: #{tpu_custom_call.1} parent=47 // pred_check
          %p2670 = pneg %p234
        $region74: #{tpu_custom_call.1} parent=47 // pred_check_branch
          %2672 = sbr.rel (%p2670) target = $region76
        $region75: #{tpu_custom_call.1} parent=47 // pred_region
          %s2674 = ssub.s32 4096, 4096
          %2675 = vsyncadd %s2666, %s2674
          %s2676 = smul.addr %s30, 32
          %s2677 = smul.addr %s29, 64
          %s2678 = sadd.s32 %s2676, %s2677
          %s2679 = smul.addr %s2678, 128
          %s2680 = scalar_lea.hbm %s7, %s2679
          %s2681 = sshll.u32 %s2669, 4
          %s2682 = int_to_ptr.vmem [resolvable:$true] %s2681
          %2687 = dma.vmem_to_hbm [thread:$0]  %s2682, 4096, %s2680, %s2666, 128, 128, 8
        $region76: #{tpu_custom_call.1} parent=47 // pred_fallthru
          _
      $region48: #{tpu_custom_call.1} parent=5 // pred_fallthru
        _
      %p2688 = scmp.le.s32.totalorder 2, %s20
      // Predicated region
      $region77: #{tpu_custom_call.1} parent=5 // pred_check
        %p2689 = pneg %p2688
      $region78: #{tpu_custom_call.1} parent=5 // pred_check_branch
        %2691 = sbr.rel (%p2689) target = $region80
      $region79: #{tpu_custom_call.1} parent=5 // pred_region
        %s2692 = ssub.s32 %s20, 2
        // Predicated region
        $region81: #{tpu_custom_call.1} parent=79 // pred_check
          %p2693 = pneg %p240
        $region82: #{tpu_custom_call.1} parent=79 // pred_check_branch
          %2695 = sbr.rel (%p2693) target = $region84
        $region83: #{tpu_custom_call.1} parent=79 // pred_region
          %s2696 = sand.u32 %s225, 1
          %s2697 = scalar_lea.sflag [#allocation4], %s2696
          %s2698 = sand.u32 %s225, 1
          %s2699 = smul.addr %s2698, 256
          %s2700 = scalar_lea.vmem [#allocation11], %s2699
          %2701 = dma.done %s2697, 4096
        $region84: #{tpu_custom_call.1} parent=79 // pred_fallthru
          _
      $region80: #{tpu_custom_call.1} parent=5 // pred_fallthru
        _
    $region6: #{tpu_custom_call.1} parent=1 // loop_footer
      %s24 = sadd.s32 1, %s20
    $region7: #{tpu_custom_call.1} parent=1 // loop_footer_branch
      %19 = sbr.rel target = $region3
    $region8: #{tpu_custom_call.1} parent=1 // loop_exit
      _
    %2702 = vsyncpa [#allocation3], 1
    %s2703 = scalar_lea.sflag [#allocation3], 1
    %2704 = vsyncpa %s2703, 1
    %2705 = vsyncpa [#allocation6], 1
    %2706 = vsyncpa [#allocation4], 1
    %s2707 = scalar_lea.sflag [#allocation4], 1
    %2708 = vsyncpa %s2707, 1

</llo_original>
